<compile_context>
chip_gen: v5e
topology: v5e:2x2
jax: 0.10.0
libtpu: 0.0.40
codegen_flags: <defaults>
</compile_context>

<pallas_src>
import functools

import jax
import jax.numpy as jnp
from jax.experimental import pallas as pl
from jax.experimental.pallas import tpu as pltpu


def _round_up(x, m):
    return (x + m - 1) // m * m


# ------------------------------ fused kernel --------------------------------

def _fused_disc_kernel(cols1_ref, w1_ref, w2_ref, b2_ref, wfc_ref, bfc_ref,
                       out_ref, y1_ref, *, n_batch, r_rows, q_cols, neg_slope):
    """Whole Discriminator forward on VMEM-resident blocks.

    cols1_ref : (4*N*R, Kp) bf16  conv1 im2col patches, parity-packed, with a
                                  trailing ones column (bias) on real rows
    w1_ref    : (Kp, 64)    bf16  conv1 weight (kh,kw,ci)-major + b1 row
    w2_ref    : (9, 64, 128) bf16 conv2 weight per tap (kh*3+kw, ci, co)
    b2_ref    : (1, 128)    f32
    wfc_ref   : (R, 128)    f32   linear weight permuted to the y2 layout
                                  (exact zeros on spatial-padding rows)
    bfc_ref   : (1, 1)      f32
    out_ref   : (N, 1)      f32
    y1_ref    : (4*N*R, 64) f32   VMEM scratch holding the packed conv1 act.
    """
    nr = n_batch * r_rows  # rows of the conv2 accumulator (one parity group)

    # ---- Conv2d(c, 64, 3, s=2, p=1) + bias (folded) + LeakyReLU(0.2).
    # Parity-padding rows have all-zero patches (incl. the bias column), so
    # they come out exactly 0 == conv2's zero padding; no mask needed.
    a1 = jnp.dot(cols1_ref[...], w1_ref[...],
                 preferred_element_type=jnp.float32)
    y1_ref[...] = jnp.where(a1 >= 0.0, a1, neg_slope * a1)
    # TODO(synk): training-mode Dropout(0.3) (RNG mask) not implemented; eval identity.

    # ---- Conv2d(64, 128, 3, s=2, p=1): 9 shifted matmuls over the packed y1.
    # Tap (kh, kw) reads parity group g = (kh%2, kw%2) at a constant row
    # offset; with Q padded to 8 the kh-shift offsets are sublane-aligned.
    # NOTE (checked statically in the wrapper): taps with a nonzero offset
    # read a few rows past their (sample, parity) block; those reads only land
    # on accumulator rows whose wfc entries are zero, so they never reach the
    # output.
    acc = None
    for kh in range(3):
        for kw in range(3):
            g = (kh % 2) * 2 + (kw % 2)
            start = g * nr + (kh // 2) * q_cols + (kw // 2)
            lhs = y1_ref[start:start + nr, :].astype(jnp.bfloat16)
            d = jnp.dot(lhs, w2_ref[kh * 3 + kw],
                        preferred_element_type=jnp.float32)
            acc = d if acc is None else acc + d
    a2 = acc + b2_ref[...]
    y2 = jnp.where(a2 >= 0.0, a2, neg_slope * a2)
    # TODO(synk): Dropout(0.3) eval-mode identity (as above).

    # ---- Flatten + Linear(feat, 1): batched multiply + reduce against the
    # pre-permuted wfc (zero on padding rows), single (N, 1) store.
    c2 = y2.shape[-1]
    y2n = y2.reshape(n_batch, r_rows, c2)          # sublane-aligned split
    prod = y2n * wfc_ref[...][None, :, :]
    s = jnp.sum(prod, axis=2, keepdims=True)       # (N, R, 1) lane reduce
    s = jnp.sum(s, axis=1)                         # (N, 1)    sublane reduce
    out_ref[...] = (s + bfc_ref[...]).astype(out_ref.dtype)


# ----------------------- JAX glue: parity-packed im2col ----------------------

def _pack_conv1_patches(x_nhwc):
    """im2col for conv1 (k=3, s=2, p=1), pre-packed so that conv2's stride-2
    taps become contiguous row slices of the conv1 activation, with a trailing
    ones column that folds b1 into the conv1 matmul (and is 0 on padding rows).

    Row layout: row = g*(N*R) + n*R + i*Q + j, where g = pr*2+pc is the parity
    group of the (zero-padded) conv1 output position, Q is padded to a
    multiple of 8 so kh tap shifts are sublane-aligned, and R = P*Q.
    """
    N, H, W, C = x_nhwc.shape
    if H % 4 or W % 4:
        raise ValueError("spatial dims must be divisible by 4")
    H1, W1 = H // 2, W // 2              # conv1 output spatial dims
    H2, W2 = H1 // 2, W1 // 2            # conv2 output spatial dims
    P = H1 // 2 + 1                      # parity-grid height of padded conv1 out
    Q = _round_up(W1 // 2 + 1, 8)        # parity-grid width, sublane-aligned
    R = P * Q                            # rows per (parity group, sample) block

    # standard im2col, patch features ordered (kh, kw, ci), plus a ones column
    # for the folded bias.
    xp = jnp.pad(x_nhwc, ((0, 0), (1, 1), (1, 1), (0, 0)))
    taps = [xp[:, kh:kh + 2 * H1:2, kw:kw + 2 * W1:2, :]
            for kh in range(3) for kw in range(3)]
    taps.append(jnp.ones((N, H1, W1, 1), x_nhwc.dtype))
    patches = jnp.concatenate(taps, axis=-1)          # (N, H1, W1, 9C+1)
    K = patches.shape[-1]
    Kp = _round_up(K, 8)                              # 37 -> 40
    patches = jnp.pad(patches, ((0, 0), (0, 0), (0, 0), (0, Kp - K)))

    cols = []
    for pr in range(2):
        for pc in range(2):
            i0, j0 = 1 - pr, 1 - pc
            sub = patches[:, 1 - pr::2, 1 - pc::2, :]  # (N, H2, W2, Kp)
            canv = jnp.pad(sub, ((0, 0), (i0, P - H2 - i0),
                                 (j0, Q - W2 - j0), (0, 0)))
            cols.append(canv.reshape(N, P * Q, Kp))
    cols = jnp.stack(cols, axis=0).reshape(4 * N * R, Kp)
    return cols, (H2, W2, P, Q, R)


# ------------------------------- parameters ----------------------------------

def init_params(key, input_shape):
    """Raw parameters in the PyTorch layout (OIHW conv weights, (out,in) linear)."""
    c, h, w = input_shape
    k1, k2, k3, k4, k5, k6 = jax.random.split(key, 6)
    feat = (h // 4) * (w // 4) * 128
    return {
        "w1": jax.random.normal(k1, (64, c, 3, 3), jnp.float32) * 0.05,
        "b1": jax.random.normal(k2, (64,), jnp.float32) * 0.05,
        "w2": jax.random.normal(k3, (128, 64, 3, 3), jnp.float32) * 0.05,
        "b2": jax.random.normal(k4, (128,), jnp.float32) * 0.05,
        "wfc": jax.random.normal(k5, (1, feat), jnp.float32) * 0.02,
        "bfc": jax.random.normal(k6, (1,), jnp.float32) * 0.02,
    }


def pack_params(raw, input_shape):
    """One-time layout plumbing from PyTorch layout to the kernel layout."""
    c, h, w = input_shape
    H1, W1 = h // 2, w // 2
    H2, W2 = H1 // 2, W1 // 2
    P = H1 // 2 + 1
    Q = _round_up(W1 // 2 + 1, 8)
    c1 = raw["w1"].shape[0]          # 64
    c2 = raw["w2"].shape[0]          # 128

    K = 9 * c
    Kp = _round_up(K + 1, 8)         # +1 ones/bias column -> 40
    w1 = jnp.transpose(raw["w1"], (2, 3, 1, 0)).reshape(K, c1)   # (kh,kw,ci) x co
    w1 = jnp.concatenate([w1, raw["b1"].reshape(1, c1)], axis=0)  # bias row
    w1 = jnp.pad(w1, ((0, Kp - (K + 1)), (0, 0))).astype(jnp.bfloat16)

    w2 = jnp.transpose(raw["w2"], (2, 3, 1, 0)).reshape(9, c1, c2)
    w2 = w2.astype(jnp.bfloat16)

    # Fold PyTorch's NCHW flatten + the kernel's (oh2*Q+ow2, co) layout into
    # w_fc; padding rows are exactly zero (this is what makes the tap-slice
    # contamination harmless).
    w_hwc = jnp.transpose(raw["wfc"].reshape(c2, H2, W2), (1, 2, 0))
    wfc = jnp.pad(w_hwc, ((0, P - H2), (0, Q - W2), (0, 0))).reshape(P * Q, c2)

    return {
        "w1": w1,
        "w2": w2,
        "b2": raw["b2"].reshape(1, c2).astype(jnp.float32),
        "wfc": wfc.astype(jnp.float32),
        "bfc": raw["bfc"].reshape(1, 1).astype(jnp.float32),
    }


# ------------------------------- forward pass ---------------------------------

def discriminator_forward(packed, x_nchw, *, negative_slope=0.2):
    x = jnp.transpose(x_nchw, (0, 2, 3, 1)).astype(jnp.bfloat16)  # NCHW -> NHWC
    N = x.shape[0]
    cols1, (H2, W2, P, Q, R) = _pack_conv1_patches(x)
    rows, kp = cols1.shape
    c1 = packed["w1"].shape[1]
    nr = N * R

    # Static checks of the tap-slice invariant (review correctness concern):
    # every tap slice stays within the y1 scratch, and any rows it reads past
    # its own (sample, parity) block correspond to accumulator rows whose wfc
    # entries are zero (spatial padding), so they cannot reach the output.
    last_real_idx = (H2 - 1) * Q + (W2 - 1)
    for kh in range(3):
        for kw in range(3):
            g = (kh % 2) * 2 + (kw % 2)
            o = (kh // 2) * Q + (kw // 2)
            assert g * nr + o + nr <= rows, "conv2 tap slice out of bounds"
            assert o <= R - 1 - last_real_idx, \
                "conv2 tap offset would contaminate a real output row"

    kernel = functools.partial(
        _fused_disc_kernel, n_batch=N, r_rows=R, q_cols=Q,
        neg_slope=negative_slope)

    return pl.pallas_call(
        kernel,
        out_shape=jax.ShapeDtypeStruct((N, 1), jnp.float32),
        grid=(1,),
        in_specs=[
            pl.BlockSpec((rows, kp), lambda i: (0, 0)),
            pl.BlockSpec(packed["w1"].shape, lambda i: (0, 0)),
            pl.BlockSpec(packed["w2"].shape, lambda i: (0, 0, 0)),
            pl.BlockSpec(packed["b2"].shape, lambda i: (0, 0)),
            pl.BlockSpec(packed["wfc"].shape, lambda i: (0, 0)),
            pl.BlockSpec(packed["bfc"].shape, lambda i: (0, 0)),
        ],
        out_specs=pl.BlockSpec((N, 1), lambda i: (0, 0)),
        scratch_shapes=[pltpu.VMEM((rows, c1), jnp.float32)],
        compiler_params=pltpu.CompilerParams(
            dimension_semantics=("arbitrary",),
            # Let XLA fuse the im2col pad/slice/concat producer chain into the
            # patches-input DMA (weights are plain parameters, no producers).
            allow_input_fusion=[True, False, False, False, False, False]),
    )(cols1, packed["w1"], packed["w2"], packed["b2"], packed["wfc"],
      packed["bfc"])


# ----------------------------- pure-JAX reference -----------------------------

def reference_forward(raw, x_nchw, negative_slope=0.2):
    hp = jax.lax.Precision.HIGHEST
    dn1 = jax.lax.conv_dimension_numbers(x_nchw.shape, raw["w1"].shape,
                                         ("NCHW", "OIHW", "NCHW"))
    y = jax.lax.conv_general_dilated(x_nchw, raw["w1"], (2, 2),
                                     ((1, 1), (1, 1)), dimension_numbers=dn1,
                                     precision=hp)
    y = y + raw["b1"][None, :, None, None]
    y = jnp.where(y >= 0, y, negative_slope * y)
    dn2 = jax.lax.conv_dimension_numbers(y.shape, raw["w2"].shape,
                                         ("NCHW", "OIHW", "NCHW"))
    y = jax.lax.conv_general_dilated(y, raw["w2"], (2, 2),
                                     ((1, 1), (1, 1)), dimension_numbers=dn2,
                                     precision=hp)
    y = y + raw["b2"][None, :, None, None]
    y = jnp.where(y >= 0, y, negative_slope * y)
    feat = y.reshape(y.shape[0], -1)
    return jnp.dot(feat, raw["wfc"].T, precision=hp) + raw["bfc"]


# ----------------------------------- main --------------------------------------

if __name__ == "__main__":
    key = jax.random.PRNGKey(0)
    k_params, k_x = jax.random.split(key)

    batch, c, h, w = 2, 4, 16, 16
    raw = init_params(k_params, (c, h, w))
    packed = pack_params(raw, (c, h, w))
    x = jax.random.normal(k_x, (batch, c, h, w), jnp.float32)

    fwd = jax.jit(discriminator_forward)
    out = jax.block_until_ready(fwd(packed, x))
    assert out.shape == (batch, 1), out.shape

    # Correctness check against a plain-JAX f32 HIGHEST-precision reference.
    # The kernel uses bf16 MXU operands with f32 accumulation, so the
    # tolerance is loosened to 3e-2 (observed errors are ~1e-2 or less on
    # ~0.4-magnitude outputs).
    ref = jax.block_until_ready(reference_forward(raw, x))
    assert jnp.allclose(out, ref, atol=3e-2, rtol=3e-2), (
        "max abs err = %g" % float(jnp.max(jnp.abs(out - ref))))

    print("KERNEL_OK")
</pallas_src>

<mosaic_0001>
module attributes {stable_mosaic.version = 11 : i64} {
  func.func @_fused_disc_kernel(%arg0: i32, %arg1: memref<320x40xbf16, #tpu.memory_space<vmem>>, %arg2: memref<40x64xbf16, #tpu.memory_space<vmem>>, %arg3: memref<9x64x128xbf16, #tpu.memory_space<vmem>>, %arg4: memref<1x128xf32, #tpu.memory_space<vmem>>, %arg5: memref<40x128xf32, #tpu.memory_space<vmem>>, %arg6: memref<1x1xf32, #tpu.memory_space<vmem>>, %arg7: memref<2x1xf32, #tpu.memory_space<vmem>>, %arg8: memref<320x64xf32, #tpu.memory_space<vmem>>) attributes {dimension_semantics = [#tpu.dimension_semantics<arbitrary>], iteration_bounds = array<i64: 1>, scalar_prefetch = 0 : i64, scratch_operands = 1 : i64, tpu.core_type = #tpu.core_type<tc>, window_params = [{pipeline_mode = #tpu.pipeline_mode<synchronous>, transform_indices = @transform_0, window_bounds = array<i64: 320, 40>}, {pipeline_mode = #tpu.pipeline_mode<synchronous>, transform_indices = @transform_1, window_bounds = array<i64: 40, 64>}, {pipeline_mode = #tpu.pipeline_mode<synchronous>, transform_indices = @transform_2, window_bounds = array<i64: 9, 64, 128>}, {pipeline_mode = #tpu.pipeline_mode<synchronous>, transform_indices = @transform_3, window_bounds = array<i64: 1, 128>}, {pipeline_mode = #tpu.pipeline_mode<synchronous>, transform_indices = @transform_4, window_bounds = array<i64: 40, 128>}, {pipeline_mode = #tpu.pipeline_mode<synchronous>, transform_indices = @transform_5, window_bounds = array<i64: 1, 1>}, {pipeline_mode = #tpu.pipeline_mode<synchronous>, transform_indices = @transform_6, window_bounds = array<i64: 2, 1>}]} {
    %c0 = arith.constant 0 : index
    %c0_0 = arith.constant 0 : index
    %0 = vector.load %arg1[%c0, %c0_0] : memref<320x40xbf16, #tpu.memory_space<vmem>>, vector<320x40xbf16>
    %c0_1 = arith.constant 0 : index
    %c0_2 = arith.constant 0 : index
    %1 = vector.load %arg2[%c0_1, %c0_2] : memref<40x64xbf16, #tpu.memory_space<vmem>>, vector<40x64xbf16>
    %cst = arith.constant dense<0.000000e+00> : vector<320x64xf32>
    %2 = tpu.matmul %0, %1, %cst {dimension_numbers = #tpu.dot_dimension_numbers<[1], [0], [0], [1], [0, 0, 1, 1], [], []>} : vector<320x40xbf16>, vector<40x64xbf16>, vector<320x64xf32> -> vector<320x64xf32>
    %cst_3 = arith.constant 0.000000e+00 : f32
    %3 = vector.broadcast %cst_3 : f32 to vector<320x64xf32>
    %4 = arith.cmpf oge, %2, %3 : vector<320x64xf32>
    %cst_4 = arith.constant 2.000000e-01 : f32
    %5 = vector.broadcast %cst_4 : f32 to vector<320x64xf32>
    %6 = arith.mulf %5, %2 : vector<320x64xf32>
    %7 = arith.select %4, %2, %6 : vector<320x64xi1>, vector<320x64xf32>
    %c0_5 = arith.constant 0 : index
    %c0_6 = arith.constant 0 : index
    %8 = vector.load %arg8[%c0_5, %c0_6] : memref<320x64xf32, #tpu.memory_space<vmem>>, vector<320x64xf32>
    tpu.vector_store %arg8[%c0_5, %c0_6], %7 {strides = array<i32>} : memref<320x64xf32, #tpu.memory_space<vmem>>, vector<320x64xf32>,
    %c0_7 = arith.constant 0 : index
    %c0_8 = arith.constant 0 : index
    %9 = vector.load %arg8[%c0_7, %c0_8] : memref<320x64xf32, #tpu.memory_space<vmem>>, vector<80x64xf32>
    %10 = arith.truncf %9 : vector<80x64xf32> to vector<80x64xbf16>
    %c0_9 = arith.constant 0 : index
    %c0_10 = arith.constant 0 : index
    %c0_11 = arith.constant 0 : index
    %11 = vector.load %arg3[%c0_9, %c0_10, %c0_11] : memref<9x64x128xbf16, #tpu.memory_space<vmem>>, vector<1x64x128xbf16>
    %12 = vector.shape_cast %11 : vector<1x64x128xbf16> to vector<64x128xbf16>
    %cst_12 = arith.constant dense<0.000000e+00> : vector<80x128xf32>
    %13 = tpu.matmul %10, %12, %cst_12 {dimension_numbers = #tpu.dot_dimension_numbers<[1], [0], [0], [1], [0, 0, 1, 1], [], []>} : vector<80x64xbf16>, vector<64x128xbf16>, vector<80x128xf32> -> vector<80x128xf32>
    %c80 = arith.constant 80 : index
    %c0_13 = arith.constant 0 : index
    %14 = vector.load %arg8[%c80, %c0_13] : memref<320x64xf32, #tpu.memory_space<vmem>>, vector<80x64xf32>
    %15 = arith.truncf %14 : vector<80x64xf32> to vector<80x64xbf16>
    %c1 = arith.constant 1 : index
    %c0_14 = arith.constant 0 : index
    %c0_15 = arith.constant 0 : index
    %16 = vector.load %arg3[%c1, %c0_14, %c0_15] : memref<9x64x128xbf16, #tpu.memory_space<vmem>>, vector<1x64x128xbf16>
    %17 = vector.shape_cast %16 : vector<1x64x128xbf16> to vector<64x128xbf16>
    %cst_16 = arith.constant dense<0.000000e+00> : vector<80x128xf32>
    %18 = tpu.matmul %15, %17, %cst_16 {dimension_numbers = #tpu.dot_dimension_numbers<[1], [0], [0], [1], [0, 0, 1, 1], [], []>} : vector<80x64xbf16>, vector<64x128xbf16>, vector<80x128xf32> -> vector<80x128xf32>
    %19 = arith.addf %13, %18 : vector<80x128xf32>
    %c1_17 = arith.constant 1 : index
    %c0_18 = arith.constant 0 : index
    %20 = vector.load %arg8[%c1_17, %c0_18] : memref<320x64xf32, #tpu.memory_space<vmem>>, vector<80x64xf32>
    %21 = arith.truncf %20 : vector<80x64xf32> to vector<80x64xbf16>
    %c2 = arith.constant 2 : index
    %c0_19 = arith.constant 0 : index
    %c0_20 = arith.constant 0 : index
    %22 = vector.load %arg3[%c2, %c0_19, %c0_20] : memref<9x64x128xbf16, #tpu.memory_space<vmem>>, vector<1x64x128xbf16>
    %23 = vector.shape_cast %22 : vector<1x64x128xbf16> to vector<64x128xbf16>
    %cst_21 = arith.constant dense<0.000000e+00> : vector<80x128xf32>
    %24 = tpu.matmul %21, %23, %cst_21 {dimension_numbers = #tpu.dot_dimension_numbers<[1], [0], [0], [1], [0, 0, 1, 1], [], []>} : vector<80x64xbf16>, vector<64x128xbf16>, vector<80x128xf32> -> vector<80x128xf32>
    %25 = arith.addf %19, %24 : vector<80x128xf32>
    %c160 = arith.constant 160 : index
    %c0_22 = arith.constant 0 : index
    %26 = vector.load %arg8[%c160, %c0_22] : memref<320x64xf32, #tpu.memory_space<vmem>>, vector<80x64xf32>
    %27 = arith.truncf %26 : vector<80x64xf32> to vector<80x64xbf16>
    %c3 = arith.constant 3 : index
    %c0_23 = arith.constant 0 : index
    %c0_24 = arith.constant 0 : index
    %28 = vector.load %arg3[%c3, %c0_23, %c0_24] : memref<9x64x128xbf16, #tpu.memory_space<vmem>>, vector<1x64x128xbf16>
    %29 = vector.shape_cast %28 : vector<1x64x128xbf16> to vector<64x128xbf16>
    %cst_25 = arith.constant dense<0.000000e+00> : vector<80x128xf32>
    %30 = tpu.matmul %27, %29, %cst_25 {dimension_numbers = #tpu.dot_dimension_numbers<[1], [0], [0], [1], [0, 0, 1, 1], [], []>} : vector<80x64xbf16>, vector<64x128xbf16>, vector<80x128xf32> -> vector<80x128xf32>
    %31 = arith.addf %25, %30 : vector<80x128xf32>
    %c240 = arith.constant 240 : index
    %c0_26 = arith.constant 0 : index
    %32 = vector.load %arg8[%c240, %c0_26] : memref<320x64xf32, #tpu.memory_space<vmem>>, vector<80x64xf32>
    %33 = arith.truncf %32 : vector<80x64xf32> to vector<80x64xbf16>
    %c4 = arith.constant 4 : index
    %c0_27 = arith.constant 0 : index
    %c0_28 = arith.constant 0 : index
    %34 = vector.load %arg3[%c4, %c0_27, %c0_28] : memref<9x64x128xbf16, #tpu.memory_space<vmem>>, vector<1x64x128xbf16>
    %35 = vector.shape_cast %34 : vector<1x64x128xbf16> to vector<64x128xbf16>
    %cst_29 = arith.constant dense<0.000000e+00> : vector<80x128xf32>
    %36 = tpu.matmul %33, %35, %cst_29 {dimension_numbers = #tpu.dot_dimension_numbers<[1], [0], [0], [1], [0, 0, 1, 1], [], []>} : vector<80x64xbf16>, vector<64x128xbf16>, vector<80x128xf32> -> vector<80x128xf32>
    %37 = arith.addf %31, %36 : vector<80x128xf32>
    %c161 = arith.constant 161 : index
    %c0_30 = arith.constant 0 : index
    %38 = vector.load %arg8[%c161, %c0_30] : memref<320x64xf32, #tpu.memory_space<vmem>>, vector<80x64xf32>
    %39 = arith.truncf %38 : vector<80x64xf32> to vector<80x64xbf16>
    %c5 = arith.constant 5 : index
    %c0_31 = arith.constant 0 : index
    %c0_32 = arith.constant 0 : index
    %40 = vector.load %arg3[%c5, %c0_31, %c0_32] : memref<9x64x128xbf16, #tpu.memory_space<vmem>>, vector<1x64x128xbf16>
    %41 = vector.shape_cast %40 : vector<1x64x128xbf16> to vector<64x128xbf16>
    %cst_33 = arith.constant dense<0.000000e+00> : vector<80x128xf32>
    %42 = tpu.matmul %39, %41, %cst_33 {dimension_numbers = #tpu.dot_dimension_numbers<[1], [0], [0], [1], [0, 0, 1, 1], [], []>} : vector<80x64xbf16>, vector<64x128xbf16>, vector<80x128xf32> -> vector<80x128xf32>
    %43 = arith.addf %37, %42 : vector<80x128xf32>
    %c8 = arith.constant 8 : index
    %c0_34 = arith.constant 0 : index
    %44 = vector.load %arg8[%c8, %c0_34] : memref<320x64xf32, #tpu.memory_space<vmem>>, vector<80x64xf32>
    %45 = arith.truncf %44 : vector<80x64xf32> to vector<80x64xbf16>
    %c6 = arith.constant 6 : index
    %c0_35 = arith.constant 0 : index
    %c0_36 = arith.constant 0 : index
    %46 = vector.load %arg3[%c6, %c0_35, %c0_36] : memref<9x64x128xbf16, #tpu.memory_space<vmem>>, vector<1x64x128xbf16>
    %47 = vector.shape_cast %46 : vector<1x64x128xbf16> to vector<64x128xbf16>
    %cst_37 = arith.constant dense<0.000000e+00> : vector<80x128xf32>
    %48 = tpu.matmul %45, %47, %cst_37 {dimension_numbers = #tpu.dot_dimension_numbers<[1], [0], [0], [1], [0, 0, 1, 1], [], []>} : vector<80x64xbf16>, vector<64x128xbf16>, vector<80x128xf32> -> vector<80x128xf32>
    %49 = arith.addf %43, %48 : vector<80x128xf32>
    %c88 = arith.constant 88 : index
    %c0_38 = arith.constant 0 : index
    %50 = vector.load %arg8[%c88, %c0_38] : memref<320x64xf32, #tpu.memory_space<vmem>>, vector<80x64xf32>
    %51 = arith.truncf %50 : vector<80x64xf32> to vector<80x64xbf16>
    %c7 = arith.constant 7 : index
    %c0_39 = arith.constant 0 : index
    %c0_40 = arith.constant 0 : index
    %52 = vector.load %arg3[%c7, %c0_39, %c0_40] : memref<9x64x128xbf16, #tpu.memory_space<vmem>>, vector<1x64x128xbf16>
    %53 = vector.shape_cast %52 : vector<1x64x128xbf16> to vector<64x128xbf16>
    %cst_41 = arith.constant dense<0.000000e+00> : vector<80x128xf32>
    %54 = tpu.matmul %51, %53, %cst_41 {dimension_numbers = #tpu.dot_dimension_numbers<[1], [0], [0], [1], [0, 0, 1, 1], [], []>} : vector<80x64xbf16>, vector<64x128xbf16>, vector<80x128xf32> -> vector<80x128xf32>
    %55 = arith.addf %49, %54 : vector<80x128xf32>
    %c9 = arith.constant 9 : index
    %c0_42 = arith.constant 0 : index
    %56 = vector.load %arg8[%c9, %c0_42] : memref<320x64xf32, #tpu.memory_space<vmem>>, vector<80x64xf32>
    %57 = arith.truncf %56 : vector<80x64xf32> to vector<80x64xbf16>
    %c8_43 = arith.constant 8 : index
    %c0_44 = arith.constant 0 : index
    %c0_45 = arith.constant 0 : index
    %58 = vector.load %arg3[%c8_43, %c0_44, %c0_45] : memref<9x64x128xbf16, #tpu.memory_space<vmem>>, vector<1x64x128xbf16>
    %59 = vector.shape_cast %58 : vector<1x64x128xbf16> to vector<64x128xbf16>
    %cst_46 = arith.constant dense<0.000000e+00> : vector<80x128xf32>
    %60 = tpu.matmul %57, %59, %cst_46 {dimension_numbers = #tpu.dot_dimension_numbers<[1], [0], [0], [1], [0, 0, 1, 1], [], []>} : vector<80x64xbf16>, vector<64x128xbf16>, vector<80x128xf32> -> vector<80x128xf32>
    %61 = arith.addf %55, %60 : vector<80x128xf32>
    %c0_47 = arith.constant 0 : index
    %c0_48 = arith.constant 0 : index
    %62 = vector.load %arg4[%c0_47, %c0_48] : memref<1x128xf32, #tpu.memory_space<vmem>>, vector<1x128xf32>
    %63 = vector.broadcast %62 : vector<1x128xf32> to vector<80x128xf32>
    %64 = arith.addf %61, %63 : vector<80x128xf32>
    %cst_49 = arith.constant 0.000000e+00 : f32
    %65 = vector.broadcast %cst_49 : f32 to vector<80x128xf32>
    %66 = arith.cmpf oge, %64, %65 : vector<80x128xf32>
    %cst_50 = arith.constant 2.000000e-01 : f32
    %67 = vector.broadcast %cst_50 : f32 to vector<80x128xf32>
    %68 = arith.mulf %67, %64 : vector<80x128xf32>
    %69 = arith.select %66, %64, %68 : vector<80x128xi1>, vector<80x128xf32>
    %70 = vector.shape_cast %69 : vector<80x128xf32> to vector<2x40x128xf32>
    %c0_51 = arith.constant 0 : index
    %c0_52 = arith.constant 0 : index
    %71 = vector.load %arg5[%c0_51, %c0_52] : memref<40x128xf32, #tpu.memory_space<vmem>>, vector<40x128xf32>
    %72 = vector.shape_cast %71 : vector<40x128xf32> to vector<1x40x128xf32>
    %73 = vector.broadcast %72 : vector<1x40x128xf32> to vector<2x40x128xf32>
    %74 = arith.mulf %70, %73 : vector<2x40x128xf32>
    %cst_53 = arith.constant dense<0.000000e+00> : vector<2x40xf32>
    %75 = vector.multi_reduction <add>, %74, %cst_53 [2] : vector<2x40x128xf32> to vector<2x40xf32>
    %76 = vector.shape_cast %75 : vector<2x40xf32> to vector<2x40x1xf32>
    %cst_54 = arith.constant dense<0.000000e+00> : vector<2x1xf32>
    %77 = vector.multi_reduction <add>, %76, %cst_54 [1] : vector<2x40x1xf32> to vector<2x1xf32>
    %c0_55 = arith.constant 0 : index
    %c0_56 = arith.constant 0 : index
    %78 = vector.load %arg6[%c0_55, %c0_56] : memref<1x1xf32, #tpu.memory_space<vmem>>, vector<1x1xf32>
    %79 = vector.broadcast %78 : vector<1x1xf32> to vector<2x1xf32>
    %80 = arith.addf %77, %79 : vector<2x1xf32>
    %c0_57 = arith.constant 0 : index
    %c0_58 = arith.constant 0 : index
    %81 = vector.load %arg7[%c0_57, %c0_58] : memref<2x1xf32, #tpu.memory_space<vmem>>, vector<2x1xf32>
    tpu.vector_store %arg7[%c0_57, %c0_58], %80 {strides = array<i32>} : memref<2x1xf32, #tpu.memory_space<vmem>>, vector<2x1xf32>,
    return
  }
  func.func @transform_0(%arg0: i32) -> (i32, i32) {
    %c0_i32 = arith.constant 0 : i32
    %c0_i32_0 = arith.constant 0 : i32
    %c0_i32_1 = arith.constant 0 : i32
    return %c0_i32, %c0_i32_0 : i32, i32
  }
  func.func @transform_1(%arg0: i32) -> (i32, i32) {
    %c0_i32 = arith.constant 0 : i32
    %c0_i32_0 = arith.constant 0 : i32
    %c0_i32_1 = arith.constant 0 : i32
    return %c0_i32, %c0_i32_0 : i32, i32
  }
  func.func @transform_2(%arg0: i32) -> (i32, i32, i32) {
    %c0_i32 = arith.constant 0 : i32
    %c0_i32_0 = arith.constant 0 : i32
    %c0_i32_1 = arith.constant 0 : i32
    %c0_i32_2 = arith.constant 0 : i32
    return %c0_i32, %c0_i32_0, %c0_i32_1 : i32, i32, i32
  }
  func.func @transform_3(%arg0: i32) -> (i32, i32) {
    %c0_i32 = arith.constant 0 : i32
    %c0_i32_0 = arith.constant 0 : i32
    %c0_i32_1 = arith.constant 0 : i32
    return %c0_i32, %c0_i32_0 : i32, i32
  }
  func.func @transform_4(%arg0: i32) -> (i32, i32) {
    %c0_i32 = arith.constant 0 : i32
    %c0_i32_0 = arith.constant 0 : i32
    %c0_i32_1 = arith.constant 0 : i32
    return %c0_i32, %c0_i32_0 : i32, i32
  }
  func.func @transform_5(%arg0: i32) -> (i32, i32) {
    %c0_i32 = arith.constant 0 : i32
    %c0_i32_0 = arith.constant 0 : i32
    %c0_i32_1 = arith.constant 0 : i32
    return %c0_i32, %c0_i32_0 : i32, i32
  }
  func.func @transform_6(%arg0: i32) -> (i32, i32) {
    %c0_i32 = arith.constant 0 : i32
    %c0_i32_0 = arith.constant 0 : i32
    %c0_i32_1 = arith.constant 0 : i32
    return %c0_i32, %c0_i32_0 : i32, i32
  }
}

</mosaic_0001>

<llo_original>
// kernel: discriminator_forward.1
$region0: #{discriminator_forward.1}
  #allocation0 [shape = 'u32[]', space=smem, size = 0x4, offset = 0x4, fixed_abs, tag = 'smem constant byte address 0x4 - core index']
  #allocation1 [shape = 'u32[72,128]{1,0:T(1,128)}', space=vmem, size = 0x9000, scoped, tag = 'internal scratch']
  #allocation2 [shape = 'f32[320,64]{1,0:T(8,128)}', space=vmem, size = 0x28000, scoped, tag = 'scratch operand']
  #allocation3 [shape = 'f32[1,1]{1,0:T(1,128)S(1)}', space=vmem, size = 0x200, scoped, tag = 'scoped memory for discriminator_forward.1']
  %s0 = inlined_call_operand.vmem [shape: bf16[320,40], index: 0, kind: input, shape index: {}]
  %s1 = inlined_call_operand.vmem [shape: bf16[40,64], index: 1, kind: input, shape index: {}]
  %s2 = inlined_call_operand.vmem [shape: bf16[9,64,128], index: 2, kind: input, shape index: {}]
  %s3 = inlined_call_operand.vmem [shape: f32[1,128], index: 3, kind: input, shape index: {}]
  %s4 = inlined_call_operand.vmem [shape: f32[40,128], index: 4, kind: input, shape index: {}]
  %s5 = inlined_call_operand.<no memory space> [shape: f32[1,1], index: 5, kind: input, shape index: {}]
  %s6 = inlined_call_operand.vmem [shape: f32[2,1], index: 6, kind: output, shape index: {}]
  %s7 = sld [smem:[#allocation0]]
  $region34: #{discriminator_forward.1} parent=0
    _
  %s9 = ssub.s32 1, %s7
  %s10 = scalar_select 0, %s9, %s7
  %v11 = vstv %s5
  %12 = vst [vmem:[#allocation3] sm:$0x1] %v11
  // Predicated region
  $region2: #{discriminator_forward.1} parent=0 // pred_check
    _
  $region3: #{discriminator_forward.1} parent=0 // pred_check_branch
    %14 = sbr.rel (0) target = $region5
  $region4: #{discriminator_forward.1} parent=0 // pred_region
    _
  $region5: #{discriminator_forward.1} parent=0 // pred_fallthru
    _
  // Predicated region
  $region6: #{discriminator_forward.1} parent=0 // pred_check
    _
  $region7: #{discriminator_forward.1} parent=0 // pred_check_branch
    %16 = sbr.rel (0) target = $region9
  $region8: #{discriminator_forward.1} parent=0 // pred_region
    _
  $region9: #{discriminator_forward.1} parent=0 // pred_fallthru
    _
  // Predicated region
  $region10: #{discriminator_forward.1} parent=0 // pred_check
    _
  $region11: #{discriminator_forward.1} parent=0 // pred_check_branch
    %18 = sbr.rel (0) target = $region13
  $region12: #{discriminator_forward.1} parent=0 // pred_region
    _
  $region13: #{discriminator_forward.1} parent=0 // pred_fallthru
    _
  // Predicated region
  $region14: #{discriminator_forward.1} parent=0 // pred_check
    _
  $region15: #{discriminator_forward.1} parent=0 // pred_check_branch
    %20 = sbr.rel (0) target = $region17
  $region16: #{discriminator_forward.1} parent=0 // pred_region
    _
  $region17: #{discriminator_forward.1} parent=0 // pred_fallthru
    _
  // Predicated region
  $region18: #{discriminator_forward.1} parent=0 // pred_check
    _
  $region19: #{discriminator_forward.1} parent=0 // pred_check_branch
    %22 = sbr.rel (0) target = $region21
  $region20: #{discriminator_forward.1} parent=0 // pred_region
    _
  $region21: #{discriminator_forward.1} parent=0 // pred_fallthru
    _
  // Predicated region
  $region22: #{discriminator_forward.1} parent=0 // pred_check
    _
  $region23: #{discriminator_forward.1} parent=0 // pred_check_branch
    %24 = sbr.rel (0) target = $region25
  $region24: #{discriminator_forward.1} parent=0 // pred_region
    _
  $region25: #{discriminator_forward.1} parent=0 // pred_fallthru
    _
  %v26 = vld [vmem:[%s0] sm:$0xf]
  %v27 = vld [vmem:[%s0 + $0x4] sm:$0xf]
  %v28 = vld [vmem:[%s0 + $0x8] sm:$0xf]
  %v29 = vld [vmem:[%s0 + $0xc] sm:$0xf]
  %v30 = vld [vmem:[%s0 + $0x10] sm:$0xf]
  %v31 = vld [vmem:[%s0 + $0x14] sm:$0xf]
  %v32 = vld [vmem:[%s0 + $0x18] sm:$0xf]
  %v33 = vld [vmem:[%s0 + $0x1c] sm:$0xf]
  %v34 = vld [vmem:[%s0 + $0x20] sm:$0xf]
  %v35 = vld [vmem:[%s0 + $0x24] sm:$0xf]
  %v36 = vld [vmem:[%s0 + $0x28] sm:$0xf]
  %v37 = vld [vmem:[%s0 + $0x2c] sm:$0xf]
  %v38 = vld [vmem:[%s0 + $0x30] sm:$0xf]
  %v39 = vld [vmem:[%s0 + $0x34] sm:$0xf]
  %v40 = vld [vmem:[%s0 + $0x38] sm:$0xf]
  %v41 = vld [vmem:[%s0 + $0x3c] sm:$0xf]
  %v42 = vld [vmem:[%s0 + $0x40] sm:$0xf]
  %v43 = vld [vmem:[%s0 + $0x44] sm:$0xf]
  %v44 = vld [vmem:[%s0 + $0x48] sm:$0xf]
  %v45 = vld [vmem:[%s0 + $0x4c] sm:$0xf]
  %v46 = vld [vmem:[%s0 + $0x50] sm:$0xf]
  %v47 = vld [vmem:[%s0 + $0x54] sm:$0xf]
  %v48 = vld [vmem:[%s0 + $0x58] sm:$0xf]
  %v49 = vld [vmem:[%s0 + $0x5c] sm:$0xf]
  %v50 = vld [vmem:[%s0 + $0x60] sm:$0xf]
  %v51 = vld [vmem:[%s0 + $0x64] sm:$0xf]
  %v52 = vld [vmem:[%s0 + $0x68] sm:$0xf]
  %v53 = vld [vmem:[%s0 + $0x6c] sm:$0xf]
  %v54 = vld [vmem:[%s0 + $0x70] sm:$0xf]
  %v55 = vld [vmem:[%s0 + $0x74] sm:$0xf]
  %v56 = vld [vmem:[%s0 + $0x78] sm:$0xf]
  %v57 = vld [vmem:[%s0 + $0x7c] sm:$0xf]
  %v58 = vld [vmem:[%s0 + $0x80] sm:$0xf]
  %v59 = vld [vmem:[%s0 + $0x84] sm:$0xf]
  %v60 = vld [vmem:[%s0 + $0x88] sm:$0xf]
  %v61 = vld [vmem:[%s0 + $0x8c] sm:$0xf]
  %v62 = vld [vmem:[%s0 + $0x90] sm:$0xf]
  %v63 = vld [vmem:[%s0 + $0x94] sm:$0xf]
  %v64 = vld [vmem:[%s0 + $0x98] sm:$0xf]
  %v65 = vld [vmem:[%s0 + $0x9c] sm:$0xf]
  %v66 = vld [vmem:[%s1] sm:$0xf]
  %v67 = vld [vmem:[%s1 + $0x4] sm:$0xf]
  %v68 = vld [vmem:[%s1 + $0x8] sm:$0xf]
  %v69 = vld [vmem:[%s1 + $0xc] sm:$0xf]
  %v70 = vld [vmem:[%s1 + $0x10] sm:$0xf]
  %v111 = vunpack.c.l.b16 %v26
  %v112 = vunpack.c.l.b16 %v27
  %v113 = vunpack.c.l.b16 %v28
  %v114 = vunpack.c.l.b16 %v29
  %v115 = vunpack.c.l.b16 %v30
  %v116 = vunpack.c.l.b16 %v31
  %v117 = vunpack.c.l.b16 %v32
  %v118 = vunpack.c.l.b16 %v33
  %v119 = vunpack.c.l.b16 %v34
  %v120 = vunpack.c.l.b16 %v35
  %v121 = vunpack.c.l.b16 %v36
  %v122 = vunpack.c.l.b16 %v37
  %v123 = vunpack.c.l.b16 %v38
  %v124 = vunpack.c.l.b16 %v39
  %v125 = vunpack.c.l.b16 %v40
  %v126 = vunpack.c.l.b16 %v41
  %v127 = vunpack.c.l.b16 %v42
  %v128 = vunpack.c.l.b16 %v43
  %v129 = vunpack.c.l.b16 %v44
  %v130 = vunpack.c.l.b16 %v45
  %v131 = vunpack.c.l.b16 %v46
  %v132 = vunpack.c.l.b16 %v47
  %v133 = vunpack.c.l.b16 %v48
  %v134 = vunpack.c.l.b16 %v49
  %v135 = vunpack.c.l.b16 %v50
  %v136 = vunpack.c.l.b16 %v51
  %v137 = vunpack.c.l.b16 %v52
  %v138 = vunpack.c.l.b16 %v53
  %v139 = vunpack.c.l.b16 %v54
  %v140 = vunpack.c.l.b16 %v55
  %v141 = vunpack.c.l.b16 %v56
  %v142 = vunpack.c.l.b16 %v57
  %v143 = vunpack.c.l.b16 %v58
  %v144 = vunpack.c.l.b16 %v59
  %v145 = vunpack.c.l.b16 %v60
  %v146 = vunpack.c.l.b16 %v61
  %v147 = vunpack.c.l.b16 %v62
  %v148 = vunpack.c.l.b16 %v63
  %v149 = vunpack.c.l.b16 %v64
  %v150 = vunpack.c.l.b16 %v65
  %v151 = vpack.c.b16 %v112, %v111
  %v152 = vpack.c.b16 %v114, %v113
  %v153 = vpack.c.b16 %v116, %v115
  %v154 = vpack.c.b16 %v118, %v117
  %v155 = vpack.c.b16 %v120, %v119
  %v156 = vpack.c.b16 %v122, %v121
  %v157 = vpack.c.b16 %v124, %v123
  %v158 = vpack.c.b16 %v126, %v125
  %v159 = vpack.c.b16 %v128, %v127
  %v160 = vpack.c.b16 %v130, %v129
  %v161 = vpack.c.b16 %v132, %v131
  %v162 = vpack.c.b16 %v134, %v133
  %v163 = vpack.c.b16 %v136, %v135
  %v164 = vpack.c.b16 %v138, %v137
  %v165 = vpack.c.b16 %v140, %v139
  %v166 = vpack.c.b16 %v142, %v141
  %v167 = vpack.c.b16 %v144, %v143
  %v168 = vpack.c.b16 %v146, %v145
  %v169 = vpack.c.b16 %v148, %v147
  %v170 = vpack.c.b16 %v150, %v149
  %v176 = vunpack.c.l.b16 %v66
  %v177 = vunpack.c.l.b16 %v67
  %v178 = vunpack.c.l.b16 %v68
  %v179 = vunpack.c.l.b16 %v69
  %v180 = vunpack.c.l.b16 %v70
  %v181 = vpack.c.b16 %v177, %v176
  %v182 = vpack.c.b16 %v179, %v178
  %v183 = vpack.c.b16 %v180, %v180
  %vm186 = vcmask 326656
  %v188 = vsel %vm186, %v151, 0
  %v191 = vsel %vm186, %v152, 0
  %v194 = vsel %vm186, %v153, 0
  %v197 = vsel %vm186, %v154, 0
  %v200 = vsel %vm186, %v155, 0
  %v203 = vsel %vm186, %v156, 0
  %v206 = vsel %vm186, %v157, 0
  %v209 = vsel %vm186, %v158, 0
  %v212 = vsel %vm186, %v159, 0
  %v215 = vsel %vm186, %v160, 0
  %v218 = vsel %vm186, %v161, 0
  %v221 = vsel %vm186, %v162, 0
  %v224 = vsel %vm186, %v163, 0
  %v227 = vsel %vm186, %v164, 0
  %v230 = vsel %vm186, %v165, 0
  %v233 = vsel %vm186, %v166, 0
  %v236 = vsel %vm186, %v167, 0
  %v239 = vsel %vm186, %v168, 0
  %v242 = vsel %vm186, %v169, 0
  %v245 = vsel %vm186, %v170, 0
  %vm247 = vcmask 1043456
  %v249 = vsel %vm247, %v183, 0
  %251 = vmatpush.bf16.msra.mxu0 0
  %252 = vmatpush.bf16.msra.mxu0 0
  %253 = vmatpush.bf16.msra.mxu0 0
  %254 = vmatpush.bf16.msra.mxu0 0
  %255 = vmatpush.bf16.msra.mxu0 0
  %256 = vmatpush.bf16.msra.mxu0 %v249
  %257 = vmatpush.bf16.msra.mxu0 %v182
  %258 = vmatpush.bf16.msra.mxu0 %v181
  %259 = vmatmul.bf16.gmra.mxu0 %v188
  %v260 = vpop.f32.mrf.mxu0
  %v261 = vadd.f32 0.0, %v260
  %v262 = vpop.f32.mrf.mxu0
  %v263 = vadd.f32 0.0, %v262
  %264 = vmatmul.bf16.gmra.mxu0 %v191
  %v265 = vpop.f32.mrf.mxu0
  %v266 = vadd.f32 0.0, %v265
  %v267 = vpop.f32.mrf.mxu0
  %v268 = vadd.f32 0.0, %v267
  %269 = vmatmul.bf16.gmra.mxu0 %v194
  %v270 = vpop.f32.mrf.mxu0
  %v271 = vadd.f32 0.0, %v270
  %v272 = vpop.f32.mrf.mxu0
  %v273 = vadd.f32 0.0, %v272
  %274 = vmatmul.bf16.gmra.mxu0 %v197
  %v275 = vpop.f32.mrf.mxu0
  %v276 = vadd.f32 0.0, %v275
  %v277 = vpop.f32.mrf.mxu0
  %v278 = vadd.f32 0.0, %v277
  %279 = vmatmul.bf16.gmra.mxu0 %v200
  %v280 = vpop.f32.mrf.mxu0
  %v281 = vadd.f32 0.0, %v280
  %v282 = vpop.f32.mrf.mxu0
  %v283 = vadd.f32 0.0, %v282
  %284 = vmatmul.bf16.gmra.mxu0 %v203
  %v285 = vpop.f32.mrf.mxu0
  %v286 = vadd.f32 0.0, %v285
  %v287 = vpop.f32.mrf.mxu0
  %v288 = vadd.f32 0.0, %v287
  %289 = vmatmul.bf16.gmra.mxu0 %v206
  %v290 = vpop.f32.mrf.mxu0
  %v291 = vadd.f32 0.0, %v290
  %v292 = vpop.f32.mrf.mxu0
  %v293 = vadd.f32 0.0, %v292
  %294 = vmatmul.bf16.gmra.mxu0 %v209
  %v295 = vpop.f32.mrf.mxu0
  %v296 = vadd.f32 0.0, %v295
  %v297 = vpop.f32.mrf.mxu0
  %v298 = vadd.f32 0.0, %v297
  %299 = vmatmul.bf16.gmra.mxu0 %v212
  %v300 = vpop.f32.mrf.mxu0
  %v301 = vadd.f32 0.0, %v300
  %v302 = vpop.f32.mrf.mxu0
  %v303 = vadd.f32 0.0, %v302
  %304 = vmatmul.bf16.gmra.mxu0 %v215
  %v305 = vpop.f32.mrf.mxu0
  %v306 = vadd.f32 0.0, %v305
  %v307 = vpop.f32.mrf.mxu0
  %v308 = vadd.f32 0.0, %v307
  %309 = vmatmul.bf16.gmra.mxu0 %v218
  %v310 = vpop.f32.mrf.mxu0
  %v311 = vadd.f32 0.0, %v310
  %v312 = vpop.f32.mrf.mxu0
  %v313 = vadd.f32 0.0, %v312
  %314 = vmatmul.bf16.gmra.mxu0 %v221
  %v315 = vpop.f32.mrf.mxu0
  %v316 = vadd.f32 0.0, %v315
  %v317 = vpop.f32.mrf.mxu0
  %v318 = vadd.f32 0.0, %v317
  %319 = vmatmul.bf16.gmra.mxu0 %v224
  %v320 = vpop.f32.mrf.mxu0
  %v321 = vadd.f32 0.0, %v320
  %v322 = vpop.f32.mrf.mxu0
  %v323 = vadd.f32 0.0, %v322
  %324 = vmatmul.bf16.gmra.mxu0 %v227
  %v325 = vpop.f32.mrf.mxu0
  %v326 = vadd.f32 0.0, %v325
  %v327 = vpop.f32.mrf.mxu0
  %v328 = vadd.f32 0.0, %v327
  %329 = vmatmul.bf16.gmra.mxu0 %v230
  %v330 = vpop.f32.mrf.mxu0
  %v331 = vadd.f32 0.0, %v330
  %v332 = vpop.f32.mrf.mxu0
  %v333 = vadd.f32 0.0, %v332
  %334 = vmatmul.bf16.gmra.mxu0 %v233
  %v335 = vpop.f32.mrf.mxu0
  %v336 = vadd.f32 0.0, %v335
  %v337 = vpop.f32.mrf.mxu0
  %v338 = vadd.f32 0.0, %v337
  %339 = vmatmul.bf16.gmra.mxu0 %v236
  %v340 = vpop.f32.mrf.mxu0
  %v341 = vadd.f32 0.0, %v340
  %v342 = vpop.f32.mrf.mxu0
  %v343 = vadd.f32 0.0, %v342
  %344 = vmatmul.bf16.gmra.mxu0 %v239
  %v345 = vpop.f32.mrf.mxu0
  %v346 = vadd.f32 0.0, %v345
  %v347 = vpop.f32.mrf.mxu0
  %v348 = vadd.f32 0.0, %v347
  %349 = vmatmul.bf16.gmra.mxu0 %v242
  %v350 = vpop.f32.mrf.mxu0
  %v351 = vadd.f32 0.0, %v350
  %v352 = vpop.f32.mrf.mxu0
  %v353 = vadd.f32 0.0, %v352
  %354 = vmatmul.bf16.gmra.mxu0 %v245
  %v355 = vpop.f32.mrf.mxu0
  %v356 = vadd.f32 0.0, %v355
  %v357 = vpop.f32.mrf.mxu0
  %v358 = vadd.f32 0.0, %v357
  %359 = vdwg.mxu0
  %vm360 = vcmp.ge.f32.partialorder %v261, 0.0
  %vm361 = vcmp.ge.f32.partialorder %v263, 0.0
  %vm362 = vcmp.ge.f32.partialorder %v266, 0.0
  %vm363 = vcmp.ge.f32.partialorder %v268, 0.0
  %vm364 = vcmp.ge.f32.partialorder %v271, 0.0
  %vm365 = vcmp.ge.f32.partialorder %v273, 0.0
  %vm366 = vcmp.ge.f32.partialorder %v276, 0.0
  %vm367 = vcmp.ge.f32.partialorder %v278, 0.0
  %vm368 = vcmp.ge.f32.partialorder %v281, 0.0
  %vm369 = vcmp.ge.f32.partialorder %v283, 0.0
  %vm370 = vcmp.ge.f32.partialorder %v286, 0.0
  %vm371 = vcmp.ge.f32.partialorder %v288, 0.0
  %vm372 = vcmp.ge.f32.partialorder %v291, 0.0
  %vm373 = vcmp.ge.f32.partialorder %v293, 0.0
  %vm374 = vcmp.ge.f32.partialorder %v296, 0.0
  %vm375 = vcmp.ge.f32.partialorder %v298, 0.0
  %vm376 = vcmp.ge.f32.partialorder %v301, 0.0
  %vm377 = vcmp.ge.f32.partialorder %v303, 0.0
  %vm378 = vcmp.ge.f32.partialorder %v306, 0.0
  %vm379 = vcmp.ge.f32.partialorder %v308, 0.0
  %vm380 = vcmp.ge.f32.partialorder %v311, 0.0
  %vm381 = vcmp.ge.f32.partialorder %v313, 0.0
  %vm382 = vcmp.ge.f32.partialorder %v316, 0.0
  %vm383 = vcmp.ge.f32.partialorder %v318, 0.0
  %vm384 = vcmp.ge.f32.partialorder %v321, 0.0
  %vm385 = vcmp.ge.f32.partialorder %v323, 0.0
  %vm386 = vcmp.ge.f32.partialorder %v326, 0.0
  %vm387 = vcmp.ge.f32.partialorder %v328, 0.0
  %vm388 = vcmp.ge.f32.partialorder %v331, 0.0
  %vm389 = vcmp.ge.f32.partialorder %v333, 0.0
  %vm390 = vcmp.ge.f32.partialorder %v336, 0.0
  %vm391 = vcmp.ge.f32.partialorder %v338, 0.0
  %vm392 = vcmp.ge.f32.partialorder %v341, 0.0
  %vm393 = vcmp.ge.f32.partialorder %v343, 0.0
  %vm394 = vcmp.ge.f32.partialorder %v346, 0.0
  %vm395 = vcmp.ge.f32.partialorder %v348, 0.0
  %vm396 = vcmp.ge.f32.partialorder %v351, 0.0
  %vm397 = vcmp.ge.f32.partialorder %v353, 0.0
  %vm398 = vcmp.ge.f32.partialorder %v356, 0.0
  %vm399 = vcmp.ge.f32.partialorder %v358, 0.0
  %v400 = vmul.f32 %v261, 0.2
  %v401 = vmul.f32 %v263, 0.2
  %v402 = vmul.f32 %v266, 0.2
  %v403 = vmul.f32 %v268, 0.2
  %v404 = vmul.f32 %v271, 0.2
  %v405 = vmul.f32 %v273, 0.2
  %v406 = vmul.f32 %v276, 0.2
  %v407 = vmul.f32 %v278, 0.2
  %v408 = vmul.f32 %v281, 0.2
  %v409 = vmul.f32 %v283, 0.2
  %v410 = vmul.f32 %v286, 0.2
  %v411 = vmul.f32 %v288, 0.2
  %v412 = vmul.f32 %v291, 0.2
  %v413 = vmul.f32 %v293, 0.2
  %v414 = vmul.f32 %v296, 0.2
  %v415 = vmul.f32 %v298, 0.2
  %v416 = vmul.f32 %v301, 0.2
  %v417 = vmul.f32 %v303, 0.2
  %v418 = vmul.f32 %v306, 0.2
  %v419 = vmul.f32 %v308, 0.2
  %v420 = vmul.f32 %v311, 0.2
  %v421 = vmul.f32 %v313, 0.2
  %v422 = vmul.f32 %v316, 0.2
  %v423 = vmul.f32 %v318, 0.2
  %v424 = vmul.f32 %v321, 0.2
  %v425 = vmul.f32 %v323, 0.2
  %v426 = vmul.f32 %v326, 0.2
  %v427 = vmul.f32 %v328, 0.2
  %v428 = vmul.f32 %v331, 0.2
  %v429 = vmul.f32 %v333, 0.2
  %v430 = vmul.f32 %v336, 0.2
  %v431 = vmul.f32 %v338, 0.2
  %v432 = vmul.f32 %v341, 0.2
  %v433 = vmul.f32 %v343, 0.2
  %v434 = vmul.f32 %v346, 0.2
  %v435 = vmul.f32 %v348, 0.2
  %v436 = vmul.f32 %v351, 0.2
  %v437 = vmul.f32 %v353, 0.2
  %v438 = vmul.f32 %v356, 0.2
  %v439 = vmul.f32 %v358, 0.2
  %v440 = vsel %vm360, %v261, %v400
  %v441 = vsel %vm361, %v263, %v401
  %v442 = vsel %vm362, %v266, %v402
  %v443 = vsel %vm363, %v268, %v403
  %v444 = vsel %vm364, %v271, %v404
  %v445 = vsel %vm365, %v273, %v405
  %v446 = vsel %vm366, %v276, %v406
  %v447 = vsel %vm367, %v278, %v407
  %v448 = vsel %vm368, %v281, %v408
  %v449 = vsel %vm369, %v283, %v409
  %v450 = vsel %vm370, %v286, %v410
  %v451 = vsel %vm371, %v288, %v411
  %v452 = vsel %vm372, %v291, %v412
  %v453 = vsel %vm373, %v293, %v413
  %v454 = vsel %vm374, %v296, %v414
  %v455 = vsel %vm375, %v298, %v415
  %v456 = vsel %vm376, %v301, %v416
  %v457 = vsel %vm377, %v303, %v417
  %v458 = vsel %vm378, %v306, %v418
  %v459 = vsel %vm379, %v308, %v419
  %v460 = vsel %vm380, %v311, %v420
  %v461 = vsel %vm381, %v313, %v421
  %v462 = vsel %vm382, %v316, %v422
  %v463 = vsel %vm383, %v318, %v423
  %v464 = vsel %vm384, %v321, %v424
  %v465 = vsel %vm385, %v323, %v425
  %v466 = vsel %vm386, %v326, %v426
  %v467 = vsel %vm387, %v328, %v427
  %v468 = vsel %vm388, %v331, %v428
  %v469 = vsel %vm389, %v333, %v429
  %v470 = vsel %vm390, %v336, %v430
  %v471 = vsel %vm391, %v338, %v431
  %v472 = vsel %vm392, %v341, %v432
  %v473 = vsel %vm393, %v343, %v433
  %v474 = vsel %vm394, %v346, %v434
  %v475 = vsel %vm395, %v348, %v435
  %v476 = vsel %vm396, %v351, %v436
  %v477 = vsel %vm397, %v353, %v437
  %v478 = vsel %vm398, %v356, %v438
  %v479 = vsel %vm399, %v358, %v439
  %vm480 = vcmask 523264
  %481 = vst.msk [vmem:[#allocation2] sm:$0xff] %vm480, %v440
  %482 = vst.msk [vmem:[#allocation2 + $0x8] sm:$0xff] %vm480, %v441
  %483 = vst.msk [vmem:[#allocation2 + $0x10] sm:$0xff] %vm480, %v442
  %484 = vst.msk [vmem:[#allocation2 + $0x18] sm:$0xff] %vm480, %v443
  %485 = vst.msk [vmem:[#allocation2 + $0x20] sm:$0xff] %vm480, %v444
  %486 = vst.msk [vmem:[#allocation2 + $0x28] sm:$0xff] %vm480, %v445
  %487 = vst.msk [vmem:[#allocation2 + $0x30] sm:$0xff] %vm480, %v446
  %488 = vst.msk [vmem:[#allocation2 + $0x38] sm:$0xff] %vm480, %v447
  %489 = vst.msk [vmem:[#allocation2 + $0x40] sm:$0xff] %vm480, %v448
  %490 = vst.msk [vmem:[#allocation2 + $0x48] sm:$0xff] %vm480, %v449
  %491 = vst.msk [vmem:[#allocation2 + $0x50] sm:$0xff] %vm480, %v450
  %492 = vst.msk [vmem:[#allocation2 + $0x58] sm:$0xff] %vm480, %v451
  %493 = vst.msk [vmem:[#allocation2 + $0x60] sm:$0xff] %vm480, %v452
  %494 = vst.msk [vmem:[#allocation2 + $0x68] sm:$0xff] %vm480, %v453
  %495 = vst.msk [vmem:[#allocation2 + $0x70] sm:$0xff] %vm480, %v454
  %496 = vst.msk [vmem:[#allocation2 + $0x78] sm:$0xff] %vm480, %v455
  %497 = vst.msk [vmem:[#allocation2 + $0x80] sm:$0xff] %vm480, %v456
  %498 = vst.msk [vmem:[#allocation2 + $0x88] sm:$0xff] %vm480, %v457
  %499 = vst.msk [vmem:[#allocation2 + $0x90] sm:$0xff] %vm480, %v458
  %500 = vst.msk [vmem:[#allocation2 + $0x98] sm:$0xff] %vm480, %v459
  %501 = vst.msk [vmem:[#allocation2 + $0xa0] sm:$0xff] %vm480, %v460
  %502 = vst.msk [vmem:[#allocation2 + $0xa8] sm:$0xff] %vm480, %v461
  %503 = vst.msk [vmem:[#allocation2 + $0xb0] sm:$0xff] %vm480, %v462
  %504 = vst.msk [vmem:[#allocation2 + $0xb8] sm:$0xff] %vm480, %v463
  %505 = vst.msk [vmem:[#allocation2 + $0xc0] sm:$0xff] %vm480, %v464
  %506 = vst.msk [vmem:[#allocation2 + $0xc8] sm:$0xff] %vm480, %v465
  %507 = vst.msk [vmem:[#allocation2 + $0xd0] sm:$0xff] %vm480, %v466
  %508 = vst.msk [vmem:[#allocation2 + $0xd8] sm:$0xff] %vm480, %v467
  %509 = vst.msk [vmem:[#allocation2 + $0xe0] sm:$0xff] %vm480, %v468
  %510 = vst.msk [vmem:[#allocation2 + $0xe8] sm:$0xff] %vm480, %v469
  %511 = vst.msk [vmem:[#allocation2 + $0xf0] sm:$0xff] %vm480, %v470
  %512 = vst.msk [vmem:[#allocation2 + $0xf8] sm:$0xff] %vm480, %v471
  %513 = vst.msk [vmem:[#allocation2 + $0x100] sm:$0xff] %vm480, %v472
  %514 = vst.msk [vmem:[#allocation2 + $0x108] sm:$0xff] %vm480, %v473
  %515 = vst.msk [vmem:[#allocation2 + $0x110] sm:$0xff] %vm480, %v474
  %516 = vst.msk [vmem:[#allocation2 + $0x118] sm:$0xff] %vm480, %v475
  %517 = vst.msk [vmem:[#allocation2 + $0x120] sm:$0xff] %vm480, %v476
  %518 = vst.msk [vmem:[#allocation2 + $0x128] sm:$0xff] %vm480, %v477
  %519 = vst.msk [vmem:[#allocation2 + $0x130] sm:$0xff] %vm480, %v478
  %520 = vst.msk [vmem:[#allocation2 + $0x138] sm:$0xff] %vm480, %v479
  %v521 = vld [vmem:[#allocation2] sm:$0xff]
  %v522 = vld [vmem:[#allocation2 + $0x8] sm:$0xff]
  %v523 = vld [vmem:[#allocation2 + $0x10] sm:$0xff]
  %v524 = vld [vmem:[#allocation2 + $0x18] sm:$0xff]
  %v525 = vld [vmem:[#allocation2 + $0x20] sm:$0xff]
  %v526 = vld [vmem:[#allocation2 + $0x28] sm:$0xff]
  %v527 = vld [vmem:[#allocation2 + $0x30] sm:$0xff]
  %v528 = vld [vmem:[#allocation2 + $0x38] sm:$0xff]
  %v529 = vld [vmem:[#allocation2 + $0x40] sm:$0xff]
  %v530 = vld [vmem:[#allocation2 + $0x48] sm:$0xff]
  %v531 = vpack.c.bf16 %v522, %v521
  %v532 = vpack.c.bf16 %v524, %v523
  %v533 = vpack.c.bf16 %v526, %v525
  %v534 = vpack.c.bf16 %v528, %v527
  %v535 = vpack.c.bf16 %v530, %v529
  %v536 = vld [vmem:[%s2] sm:$0xf]
  %v537 = vld [vmem:[%s2 + $0x4] sm:$0xf]
  %v538 = vld [vmem:[%s2 + $0x8] sm:$0xf]
  %v539 = vld [vmem:[%s2 + $0xc] sm:$0xf]
  %v540 = vld [vmem:[%s2 + $0x10] sm:$0xf]
  %v541 = vld [vmem:[%s2 + $0x14] sm:$0xf]
  %v542 = vld [vmem:[%s2 + $0x18] sm:$0xf]
  %v543 = vld [vmem:[%s2 + $0x1c] sm:$0xf]
  %v544 = vld [vmem:[#allocation2 + $0x50] sm:$0xff]
  %v545 = vld [vmem:[#allocation2 + $0x58] sm:$0xff]
  %v546 = vld [vmem:[#allocation2 + $0x60] sm:$0xff]
  %v547 = vld [vmem:[#allocation2 + $0x68] sm:$0xff]
  %v548 = vld [vmem:[#allocation2 + $0x70] sm:$0xff]
  %v549 = vld [vmem:[#allocation2 + $0x78] sm:$0xff]
  %v550 = vld [vmem:[#allocation2 + $0x80] sm:$0xff]
  %v551 = vld [vmem:[#allocation2 + $0x88] sm:$0xff]
  %v552 = vld [vmem:[#allocation2 + $0x90] sm:$0xff]
  %v553 = vld [vmem:[#allocation2 + $0x98] sm:$0xff]
  %v554 = vpack.c.bf16 %v545, %v544
  %v555 = vpack.c.bf16 %v547, %v546
  %v556 = vpack.c.bf16 %v549, %v548
  %v557 = vpack.c.bf16 %v551, %v550
  %v558 = vpack.c.bf16 %v553, %v552
  %s559 = scalar_lea.vmem %s2, 32
  %v560 = vld [vmem:[%s559] sm:$0xf]
  %v561 = vld [vmem:[%s559 + $0x4] sm:$0xf]
  %v562 = vld [vmem:[%s559 + $0x8] sm:$0xf]
  %v563 = vld [vmem:[%s559 + $0xc] sm:$0xf]
  %v564 = vld [vmem:[%s559 + $0x10] sm:$0xf]
  %v565 = vld [vmem:[%s559 + $0x14] sm:$0xf]
  %v566 = vld [vmem:[%s559 + $0x18] sm:$0xf]
  %v567 = vld [vmem:[%s559 + $0x1c] sm:$0xf]
  %v576 = vunpack.c.l.b16 %v560
  %v577 = vunpack.c.l.b16 %v561
  %v578 = vunpack.c.l.b16 %v562
  %v579 = vunpack.c.l.b16 %v563
  %v580 = vunpack.c.l.b16 %v564
  %v581 = vunpack.c.l.b16 %v565
  %v582 = vunpack.c.l.b16 %v566
  %v583 = vunpack.c.l.b16 %v567
  %v584 = vpack.c.b16 %v577, %v576
  %v585 = vpack.c.b16 %v579, %v578
  %v586 = vpack.c.b16 %v581, %v580
  %v587 = vpack.c.b16 %v583, %v582
  %v593 = vsel %vm480, %v554, 0
  %v596 = vsel %vm480, %v555, 0
  %v599 = vsel %vm480, %v556, 0
  %v602 = vsel %vm480, %v557, 0
  %v605 = vsel %vm480, %v558, 0
  %607 = vmatpush.bf16.msra.mxu0 0
  %608 = vmatpush.bf16.msra.mxu0 0
  %609 = vmatpush.bf16.msra.mxu0 0
  %610 = vmatpush.bf16.msra.mxu0 0
  %611 = vmatpush.bf16.msra.mxu0 %v587
  %612 = vmatpush.bf16.msra.mxu0 %v586
  %613 = vmatpush.bf16.msra.mxu0 %v585
  %614 = vmatpush.bf16.msra.mxu0 %v584
  %615 = vmatmul.bf16.gmra.mxu0 %v593
  %v616 = vpop.f32.mrf.mxu0
  %v617 = vadd.f32 0.0, %v616
  %v618 = vpop.f32.mrf.mxu0
  %v619 = vadd.f32 0.0, %v618
  %620 = vmatmul.bf16.gmra.mxu0 %v596
  %v621 = vpop.f32.mrf.mxu0
  %v622 = vadd.f32 0.0, %v621
  %v623 = vpop.f32.mrf.mxu0
  %v624 = vadd.f32 0.0, %v623
  %625 = vmatmul.bf16.gmra.mxu0 %v599
  %v626 = vpop.f32.mrf.mxu0
  %v627 = vadd.f32 0.0, %v626
  %v628 = vpop.f32.mrf.mxu0
  %v629 = vadd.f32 0.0, %v628
  %630 = vmatmul.bf16.gmra.mxu0 %v602
  %v631 = vpop.f32.mrf.mxu0
  %v632 = vadd.f32 0.0, %v631
  %v633 = vpop.f32.mrf.mxu0
  %v634 = vadd.f32 0.0, %v633
  %635 = vmatmul.bf16.gmra.mxu0 %v605
  %v636 = vpop.f32.mrf.mxu0
  %v637 = vadd.f32 0.0, %v636
  %v638 = vpop.f32.mrf.mxu0
  %v639 = vadd.f32 0.0, %v638
  %640 = vdwg.mxu0
  %v649 = vunpack.c.l.b16 %v536
  %v650 = vunpack.c.l.b16 %v537
  %v651 = vunpack.c.l.b16 %v538
  %v652 = vunpack.c.l.b16 %v539
  %v653 = vunpack.c.l.b16 %v540
  %v654 = vunpack.c.l.b16 %v541
  %v655 = vunpack.c.l.b16 %v542
  %v656 = vunpack.c.l.b16 %v543
  %v657 = vpack.c.b16 %v650, %v649
  %v658 = vpack.c.b16 %v652, %v651
  %v659 = vpack.c.b16 %v654, %v653
  %v660 = vpack.c.b16 %v656, %v655
  %v666 = vsel %vm480, %v531, 0
  %v669 = vsel %vm480, %v532, 0
  %v672 = vsel %vm480, %v533, 0
  %v675 = vsel %vm480, %v534, 0
  %v678 = vsel %vm480, %v535, 0
  %680 = vmatpush.bf16.msra.mxu0 0
  %681 = vmatpush.bf16.msra.mxu0 0
  %682 = vmatpush.bf16.msra.mxu0 0
  %683 = vmatpush.bf16.msra.mxu0 0
  %684 = vmatpush.bf16.msra.mxu0 %v660
  %685 = vmatpush.bf16.msra.mxu0 %v659
  %686 = vmatpush.bf16.msra.mxu0 %v658
  %687 = vmatpush.bf16.msra.mxu0 %v657
  %688 = vmatmul.bf16.gmra.mxu0 %v666
  %v689 = vpop.f32.mrf.mxu0
  %v690 = vadd.f32 %v617, %v689
  %v691 = vpop.f32.mrf.mxu0
  %v692 = vadd.f32 %v619, %v691
  %693 = vmatmul.bf16.gmra.mxu0 %v669
  %v694 = vpop.f32.mrf.mxu0
  %v695 = vadd.f32 %v622, %v694
  %v696 = vpop.f32.mrf.mxu0
  %v697 = vadd.f32 %v624, %v696
  %698 = vmatmul.bf16.gmra.mxu0 %v672
  %v699 = vpop.f32.mrf.mxu0
  %v700 = vadd.f32 %v627, %v699
  %v701 = vpop.f32.mrf.mxu0
  %v702 = vadd.f32 %v629, %v701
  %703 = vmatmul.bf16.gmra.mxu0 %v675
  %v704 = vpop.f32.mrf.mxu0
  %v705 = vadd.f32 %v632, %v704
  %v706 = vpop.f32.mrf.mxu0
  %v707 = vadd.f32 %v634, %v706
  %708 = vmatmul.bf16.gmra.mxu0 %v678
  %v709 = vpop.f32.mrf.mxu0
  %v710 = vadd.f32 %v637, %v709
  %v711 = vpop.f32.mrf.mxu0
  %v712 = vadd.f32 %v639, %v711
  %713 = vdwg.mxu0
  %v714 = vld [vmem:[#allocation2 + $0x1] sm:$0xff]
  %v715 = vld [vmem:[#allocation2 + $0x9] sm:$0xff]
  %v716 = vld [vmem:[#allocation2 + $0x11] sm:$0xff]
  %v717 = vld [vmem:[#allocation2 + $0x19] sm:$0xff]
  %v718 = vld [vmem:[#allocation2 + $0x21] sm:$0xff]
  %v719 = vld [vmem:[#allocation2 + $0x29] sm:$0xff]
  %v720 = vld [vmem:[#allocation2 + $0x31] sm:$0xff]
  %v721 = vld [vmem:[#allocation2 + $0x39] sm:$0xff]
  %v722 = vld [vmem:[#allocation2 + $0x41] sm:$0xff]
  %v723 = vld [vmem:[#allocation2 + $0x49] sm:$0xff]
  %v724 = vpack.c.bf16 %v715, %v714
  %v725 = vpack.c.bf16 %v717, %v716
  %v726 = vpack.c.bf16 %v719, %v718
  %v727 = vpack.c.bf16 %v721, %v720
  %v728 = vpack.c.bf16 %v723, %v722
  %s729 = scalar_lea.vmem %s2, 64
  %v730 = vld [vmem:[%s729] sm:$0xf]
  %v731 = vld [vmem:[%s729 + $0x4] sm:$0xf]
  %v732 = vld [vmem:[%s729 + $0x8] sm:$0xf]
  %v733 = vld [vmem:[%s729 + $0xc] sm:$0xf]
  %v734 = vld [vmem:[%s729 + $0x10] sm:$0xf]
  %v735 = vld [vmem:[%s729 + $0x14] sm:$0xf]
  %v736 = vld [vmem:[%s729 + $0x18] sm:$0xf]
  %v737 = vld [vmem:[%s729 + $0x1c] sm:$0xf]
  %v746 = vunpack.c.l.b16 %v730
  %v747 = vunpack.c.l.b16 %v731
  %v748 = vunpack.c.l.b16 %v732
  %v749 = vunpack.c.l.b16 %v733
  %v750 = vunpack.c.l.b16 %v734
  %v751 = vunpack.c.l.b16 %v735
  %v752 = vunpack.c.l.b16 %v736
  %v753 = vunpack.c.l.b16 %v737
  %v754 = vpack.c.b16 %v747, %v746
  %v755 = vpack.c.b16 %v749, %v748
  %v756 = vpack.c.b16 %v751, %v750
  %v757 = vpack.c.b16 %v753, %v752
  %v763 = vsel %vm480, %v724, 0
  %v766 = vsel %vm480, %v725, 0
  %v769 = vsel %vm480, %v726, 0
  %v772 = vsel %vm480, %v727, 0
  %v775 = vsel %vm480, %v728, 0
  %777 = vmatpush.bf16.msra.mxu0 0
  %778 = vmatpush.bf16.msra.mxu0 0
  %779 = vmatpush.bf16.msra.mxu0 0
  %780 = vmatpush.bf16.msra.mxu0 0
  %781 = vmatpush.bf16.msra.mxu0 %v757
  %782 = vmatpush.bf16.msra.mxu0 %v756
  %783 = vmatpush.bf16.msra.mxu0 %v755
  %784 = vmatpush.bf16.msra.mxu0 %v754
  %785 = vmatmul.bf16.gmra.mxu0 %v763
  %v786 = vpop.f32.mrf.mxu0
  %v787 = vadd.f32 0.0, %v786
  %v788 = vpop.f32.mrf.mxu0
  %v789 = vadd.f32 0.0, %v788
  %790 = vmatmul.bf16.gmra.mxu0 %v766
  %v791 = vpop.f32.mrf.mxu0
  %v792 = vadd.f32 0.0, %v791
  %v793 = vpop.f32.mrf.mxu0
  %v794 = vadd.f32 0.0, %v793
  %795 = vmatmul.bf16.gmra.mxu0 %v769
  %v796 = vpop.f32.mrf.mxu0
  %v797 = vadd.f32 0.0, %v796
  %v798 = vpop.f32.mrf.mxu0
  %v799 = vadd.f32 0.0, %v798
  %800 = vmatmul.bf16.gmra.mxu0 %v772
  %v801 = vpop.f32.mrf.mxu0
  %v802 = vadd.f32 0.0, %v801
  %v803 = vpop.f32.mrf.mxu0
  %v804 = vadd.f32 0.0, %v803
  %805 = vmatmul.bf16.gmra.mxu0 %v775
  %v806 = vpop.f32.mrf.mxu0
  %v807 = vadd.f32 0.0, %v806
  %v808 = vpop.f32.mrf.mxu0
  %v809 = vadd.f32 0.0, %v808
  %810 = vdwg.mxu0
  %v811 = vadd.f32 %v690, %v787
  %v812 = vadd.f32 %v692, %v789
  %v813 = vadd.f32 %v695, %v792
  %v814 = vadd.f32 %v697, %v794
  %v815 = vadd.f32 %v700, %v797
  %v816 = vadd.f32 %v702, %v799
  %v817 = vadd.f32 %v705, %v802
  %v818 = vadd.f32 %v707, %v804
  %v819 = vadd.f32 %v710, %v807
  %v820 = vadd.f32 %v712, %v809
  %v821 = vld [vmem:[#allocation2 + $0xa0] sm:$0xff]
  %v822 = vld [vmem:[#allocation2 + $0xa8] sm:$0xff]
  %v823 = vld [vmem:[#allocation2 + $0xb0] sm:$0xff]
  %v824 = vld [vmem:[#allocation2 + $0xb8] sm:$0xff]
  %v825 = vld [vmem:[#allocation2 + $0xc0] sm:$0xff]
  %v826 = vld [vmem:[#allocation2 + $0xc8] sm:$0xff]
  %v827 = vld [vmem:[#allocation2 + $0xd0] sm:$0xff]
  %v828 = vld [vmem:[#allocation2 + $0xd8] sm:$0xff]
  %v829 = vld [vmem:[#allocation2 + $0xe0] sm:$0xff]
  %v830 = vld [vmem:[#allocation2 + $0xe8] sm:$0xff]
  %v831 = vpack.c.bf16 %v822, %v821
  %v832 = vpack.c.bf16 %v824, %v823
  %v833 = vpack.c.bf16 %v826, %v825
  %v834 = vpack.c.bf16 %v828, %v827
  %v835 = vpack.c.bf16 %v830, %v829
  %s836 = scalar_lea.vmem %s2, 96
  %v837 = vld [vmem:[%s836] sm:$0xf]
  %v838 = vld [vmem:[%s836 + $0x4] sm:$0xf]
  %v839 = vld [vmem:[%s836 + $0x8] sm:$0xf]
  %v840 = vld [vmem:[%s836 + $0xc] sm:$0xf]
  %v841 = vld [vmem:[%s836 + $0x10] sm:$0xf]
  %v842 = vld [vmem:[%s836 + $0x14] sm:$0xf]
  %v843 = vld [vmem:[%s836 + $0x18] sm:$0xf]
  %v844 = vld [vmem:[%s836 + $0x1c] sm:$0xf]
  %v853 = vunpack.c.l.b16 %v837
  %v854 = vunpack.c.l.b16 %v838
  %v855 = vunpack.c.l.b16 %v839
  %v856 = vunpack.c.l.b16 %v840
  %v857 = vunpack.c.l.b16 %v841
  %v858 = vunpack.c.l.b16 %v842
  %v859 = vunpack.c.l.b16 %v843
  %v860 = vunpack.c.l.b16 %v844
  %v861 = vpack.c.b16 %v854, %v853
  %v862 = vpack.c.b16 %v856, %v855
  %v863 = vpack.c.b16 %v858, %v857
  %v864 = vpack.c.b16 %v860, %v859
  %v870 = vsel %vm480, %v831, 0
  %v873 = vsel %vm480, %v832, 0
  %v876 = vsel %vm480, %v833, 0
  %v879 = vsel %vm480, %v834, 0
  %v882 = vsel %vm480, %v835, 0
  %884 = vmatpush.bf16.msra.mxu0 0
  %885 = vmatpush.bf16.msra.mxu0 0
  %886 = vmatpush.bf16.msra.mxu0 0
  %887 = vmatpush.bf16.msra.mxu0 0
  %888 = vmatpush.bf16.msra.mxu0 %v864
  %889 = vmatpush.bf16.msra.mxu0 %v863
  %890 = vmatpush.bf16.msra.mxu0 %v862
  %891 = vmatpush.bf16.msra.mxu0 %v861
  %892 = vmatmul.bf16.gmra.mxu0 %v870
  %v893 = vpop.f32.mrf.mxu0
  %v894 = vadd.f32 0.0, %v893
  %v895 = vpop.f32.mrf.mxu0
  %v896 = vadd.f32 0.0, %v895
  %897 = vmatmul.bf16.gmra.mxu0 %v873
  %v898 = vpop.f32.mrf.mxu0
  %v899 = vadd.f32 0.0, %v898
  %v900 = vpop.f32.mrf.mxu0
  %v901 = vadd.f32 0.0, %v900
  %902 = vmatmul.bf16.gmra.mxu0 %v876
  %v903 = vpop.f32.mrf.mxu0
  %v904 = vadd.f32 0.0, %v903
  %v905 = vpop.f32.mrf.mxu0
  %v906 = vadd.f32 0.0, %v905
  %907 = vmatmul.bf16.gmra.mxu0 %v879
  %v908 = vpop.f32.mrf.mxu0
  %v909 = vadd.f32 0.0, %v908
  %v910 = vpop.f32.mrf.mxu0
  %v911 = vadd.f32 0.0, %v910
  %912 = vmatmul.bf16.gmra.mxu0 %v882
  %v913 = vpop.f32.mrf.mxu0
  %v914 = vadd.f32 0.0, %v913
  %v915 = vpop.f32.mrf.mxu0
  %v916 = vadd.f32 0.0, %v915
  %917 = vdwg.mxu0
  %v918 = vadd.f32 %v811, %v894
  %v919 = vadd.f32 %v812, %v896
  %v920 = vadd.f32 %v813, %v899
  %v921 = vadd.f32 %v814, %v901
  %v922 = vadd.f32 %v815, %v904
  %v923 = vadd.f32 %v816, %v906
  %v924 = vadd.f32 %v817, %v909
  %v925 = vadd.f32 %v818, %v911
  %v926 = vadd.f32 %v819, %v914
  %v927 = vadd.f32 %v820, %v916
  %v928 = vld [vmem:[#allocation2 + $0xf0] sm:$0xff]
  %v929 = vld [vmem:[#allocation2 + $0xf8] sm:$0xff]
  %v930 = vld [vmem:[#allocation2 + $0x100] sm:$0xff]
  %v931 = vld [vmem:[#allocation2 + $0x108] sm:$0xff]
  %v932 = vld [vmem:[#allocation2 + $0x110] sm:$0xff]
  %v933 = vld [vmem:[#allocation2 + $0x118] sm:$0xff]
  %v934 = vld [vmem:[#allocation2 + $0x120] sm:$0xff]
  %v935 = vld [vmem:[#allocation2 + $0x128] sm:$0xff]
  %v936 = vld [vmem:[#allocation2 + $0x130] sm:$0xff]
  %v937 = vld [vmem:[#allocation2 + $0x138] sm:$0xff]
  %v938 = vpack.c.bf16 %v929, %v928
  %v939 = vpack.c.bf16 %v931, %v930
  %v940 = vpack.c.bf16 %v933, %v932
  %v941 = vpack.c.bf16 %v935, %v934
  %v942 = vpack.c.bf16 %v937, %v936
  %s943 = scalar_lea.vmem %s2, 128
  %v944 = vld [vmem:[%s943] sm:$0xf]
  %v945 = vld [vmem:[%s943 + $0x4] sm:$0xf]
  %v946 = vld [vmem:[%s943 + $0x8] sm:$0xf]
  %v947 = vld [vmem:[%s943 + $0xc] sm:$0xf]
  %v948 = vld [vmem:[%s943 + $0x10] sm:$0xf]
  %v949 = vld [vmem:[%s943 + $0x14] sm:$0xf]
  %v950 = vld [vmem:[%s943 + $0x18] sm:$0xf]
  %v951 = vld [vmem:[%s943 + $0x1c] sm:$0xf]
  %v960 = vunpack.c.l.b16 %v944
  %v961 = vunpack.c.l.b16 %v945
  %v962 = vunpack.c.l.b16 %v946
  %v963 = vunpack.c.l.b16 %v947
  %v964 = vunpack.c.l.b16 %v948
  %v965 = vunpack.c.l.b16 %v949
  %v966 = vunpack.c.l.b16 %v950
  %v967 = vunpack.c.l.b16 %v951
  %v968 = vpack.c.b16 %v961, %v960
  %v969 = vpack.c.b16 %v963, %v962
  %v970 = vpack.c.b16 %v965, %v964
  %v971 = vpack.c.b16 %v967, %v966
  %v977 = vsel %vm480, %v938, 0
  %v980 = vsel %vm480, %v939, 0
  %v983 = vsel %vm480, %v940, 0
  %v986 = vsel %vm480, %v941, 0
  %v989 = vsel %vm480, %v942, 0
  %991 = vmatpush.bf16.msra.mxu0 0
  %992 = vmatpush.bf16.msra.mxu0 0
  %993 = vmatpush.bf16.msra.mxu0 0
  %994 = vmatpush.bf16.msra.mxu0 0
  %995 = vmatpush.bf16.msra.mxu0 %v971
  %996 = vmatpush.bf16.msra.mxu0 %v970
  %997 = vmatpush.bf16.msra.mxu0 %v969
  %998 = vmatpush.bf16.msra.mxu0 %v968
  %999 = vmatmul.bf16.gmra.mxu0 %v977
  %v1000 = vpop.f32.mrf.mxu0
  %v1001 = vadd.f32 0.0, %v1000
  %v1002 = vpop.f32.mrf.mxu0
  %v1003 = vadd.f32 0.0, %v1002
  %1004 = vmatmul.bf16.gmra.mxu0 %v980
  %v1005 = vpop.f32.mrf.mxu0
  %v1006 = vadd.f32 0.0, %v1005
  %v1007 = vpop.f32.mrf.mxu0
  %v1008 = vadd.f32 0.0, %v1007
  %1009 = vmatmul.bf16.gmra.mxu0 %v983
  %v1010 = vpop.f32.mrf.mxu0
  %v1011 = vadd.f32 0.0, %v1010
  %v1012 = vpop.f32.mrf.mxu0
  %v1013 = vadd.f32 0.0, %v1012
  %1014 = vmatmul.bf16.gmra.mxu0 %v986
  %v1015 = vpop.f32.mrf.mxu0
  %v1016 = vadd.f32 0.0, %v1015
  %v1017 = vpop.f32.mrf.mxu0
  %v1018 = vadd.f32 0.0, %v1017
  %1019 = vmatmul.bf16.gmra.mxu0 %v989
  %v1020 = vpop.f32.mrf.mxu0
  %v1021 = vadd.f32 0.0, %v1020
  %v1022 = vpop.f32.mrf.mxu0
  %v1023 = vadd.f32 0.0, %v1022
  %1024 = vdwg.mxu0
  %v1025 = vadd.f32 %v918, %v1001
  %v1026 = vadd.f32 %v919, %v1003
  %v1027 = vadd.f32 %v920, %v1006
  %v1028 = vadd.f32 %v921, %v1008
  %v1029 = vadd.f32 %v922, %v1011
  %v1030 = vadd.f32 %v923, %v1013
  %v1031 = vadd.f32 %v924, %v1016
  %v1032 = vadd.f32 %v925, %v1018
  %v1033 = vadd.f32 %v926, %v1021
  %v1034 = vadd.f32 %v927, %v1023
  %v1035 = vld [vmem:[#allocation2 + $0xa1] sm:$0xff]
  %v1036 = vld [vmem:[#allocation2 + $0xa9] sm:$0xff]
  %v1037 = vld [vmem:[#allocation2 + $0xb1] sm:$0xff]
  %v1038 = vld [vmem:[#allocation2 + $0xb9] sm:$0xff]
  %v1039 = vld [vmem:[#allocation2 + $0xc1] sm:$0xff]
  %v1040 = vld [vmem:[#allocation2 + $0xc9] sm:$0xff]
  %v1041 = vld [vmem:[#allocation2 + $0xd1] sm:$0xff]
  %v1042 = vld [vmem:[#allocation2 + $0xd9] sm:$0xff]
  %v1043 = vld [vmem:[#allocation2 + $0xe1] sm:$0xff]
  %v1044 = vld [vmem:[#allocation2 + $0xe9] sm:$0xff]
  %v1045 = vpack.c.bf16 %v1036, %v1035
  %v1046 = vpack.c.bf16 %v1038, %v1037
  %v1047 = vpack.c.bf16 %v1040, %v1039
  %v1048 = vpack.c.bf16 %v1042, %v1041
  %v1049 = vpack.c.bf16 %v1044, %v1043
  %s1050 = scalar_lea.vmem %s2, 160
  %v1051 = vld [vmem:[%s1050] sm:$0xf]
  %v1052 = vld [vmem:[%s1050 + $0x4] sm:$0xf]
  %v1053 = vld [vmem:[%s1050 + $0x8] sm:$0xf]
  %v1054 = vld [vmem:[%s1050 + $0xc] sm:$0xf]
  %v1055 = vld [vmem:[%s1050 + $0x10] sm:$0xf]
  %v1056 = vld [vmem:[%s1050 + $0x14] sm:$0xf]
  %v1057 = vld [vmem:[%s1050 + $0x18] sm:$0xf]
  %v1058 = vld [vmem:[%s1050 + $0x1c] sm:$0xf]
  %v1067 = vunpack.c.l.b16 %v1051
  %v1068 = vunpack.c.l.b16 %v1052
  %v1069 = vunpack.c.l.b16 %v1053
  %v1070 = vunpack.c.l.b16 %v1054
  %v1071 = vunpack.c.l.b16 %v1055
  %v1072 = vunpack.c.l.b16 %v1056
  %v1073 = vunpack.c.l.b16 %v1057
  %v1074 = vunpack.c.l.b16 %v1058
  %v1075 = vpack.c.b16 %v1068, %v1067
  %v1076 = vpack.c.b16 %v1070, %v1069
  %v1077 = vpack.c.b16 %v1072, %v1071
  %v1078 = vpack.c.b16 %v1074, %v1073
  %v1084 = vsel %vm480, %v1045, 0
  %v1087 = vsel %vm480, %v1046, 0
  %v1090 = vsel %vm480, %v1047, 0
  %v1093 = vsel %vm480, %v1048, 0
  %v1096 = vsel %vm480, %v1049, 0
  %1098 = vmatpush.bf16.msra.mxu0 0
  %1099 = vmatpush.bf16.msra.mxu0 0
  %1100 = vmatpush.bf16.msra.mxu0 0
  %1101 = vmatpush.bf16.msra.mxu0 0
  %1102 = vmatpush.bf16.msra.mxu0 %v1078
  %1103 = vmatpush.bf16.msra.mxu0 %v1077
  %1104 = vmatpush.bf16.msra.mxu0 %v1076
  %1105 = vmatpush.bf16.msra.mxu0 %v1075
  %1106 = vmatmul.bf16.gmra.mxu0 %v1084
  %v1107 = vpop.f32.mrf.mxu0
  %v1108 = vadd.f32 0.0, %v1107
  %v1109 = vpop.f32.mrf.mxu0
  %v1110 = vadd.f32 0.0, %v1109
  %1111 = vmatmul.bf16.gmra.mxu0 %v1087
  %v1112 = vpop.f32.mrf.mxu0
  %v1113 = vadd.f32 0.0, %v1112
  %v1114 = vpop.f32.mrf.mxu0
  %v1115 = vadd.f32 0.0, %v1114
  %1116 = vmatmul.bf16.gmra.mxu0 %v1090
  %v1117 = vpop.f32.mrf.mxu0
  %v1118 = vadd.f32 0.0, %v1117
  %v1119 = vpop.f32.mrf.mxu0
  %v1120 = vadd.f32 0.0, %v1119
  %1121 = vmatmul.bf16.gmra.mxu0 %v1093
  %v1122 = vpop.f32.mrf.mxu0
  %v1123 = vadd.f32 0.0, %v1122
  %v1124 = vpop.f32.mrf.mxu0
  %v1125 = vadd.f32 0.0, %v1124
  %1126 = vmatmul.bf16.gmra.mxu0 %v1096
  %v1127 = vpop.f32.mrf.mxu0
  %v1128 = vadd.f32 0.0, %v1127
  %v1129 = vpop.f32.mrf.mxu0
  %v1130 = vadd.f32 0.0, %v1129
  %1131 = vdwg.mxu0
  %v1132 = vadd.f32 %v1025, %v1108
  %v1133 = vadd.f32 %v1026, %v1110
  %v1134 = vadd.f32 %v1027, %v1113
  %v1135 = vadd.f32 %v1028, %v1115
  %v1136 = vadd.f32 %v1029, %v1118
  %v1137 = vadd.f32 %v1030, %v1120
  %v1138 = vadd.f32 %v1031, %v1123
  %v1139 = vadd.f32 %v1032, %v1125
  %v1140 = vadd.f32 %v1033, %v1128
  %v1141 = vadd.f32 %v1034, %v1130
  %v1142 = vld [vmem:[#allocation2 + $0x8] sm:$0xff]
  %v1143 = vld [vmem:[#allocation2 + $0x10] sm:$0xff]
  %v1144 = vld [vmem:[#allocation2 + $0x18] sm:$0xff]
  %v1145 = vld [vmem:[#allocation2 + $0x20] sm:$0xff]
  %v1146 = vld [vmem:[#allocation2 + $0x28] sm:$0xff]
  %v1147 = vld [vmem:[#allocation2 + $0x30] sm:$0xff]
  %v1148 = vld [vmem:[#allocation2 + $0x38] sm:$0xff]
  %v1149 = vld [vmem:[#allocation2 + $0x40] sm:$0xff]
  %v1150 = vld [vmem:[#allocation2 + $0x48] sm:$0xff]
  %v1151 = vld [vmem:[#allocation2 + $0x50] sm:$0xff]
  %v1152 = vpack.c.bf16 %v1143, %v1142
  %v1153 = vpack.c.bf16 %v1145, %v1144
  %v1154 = vpack.c.bf16 %v1147, %v1146
  %v1155 = vpack.c.bf16 %v1149, %v1148
  %v1156 = vpack.c.bf16 %v1151, %v1150
  %s1157 = scalar_lea.vmem %s2, 192
  %v1158 = vld [vmem:[%s1157] sm:$0xf]
  %v1159 = vld [vmem:[%s1157 + $0x4] sm:$0xf]
  %v1160 = vld [vmem:[%s1157 + $0x8] sm:$0xf]
  %v1161 = vld [vmem:[%s1157 + $0xc] sm:$0xf]
  %v1162 = vld [vmem:[%s1157 + $0x10] sm:$0xf]
  %v1163 = vld [vmem:[%s1157 + $0x14] sm:$0xf]
  %v1164 = vld [vmem:[%s1157 + $0x18] sm:$0xf]
  %v1165 = vld [vmem:[%s1157 + $0x1c] sm:$0xf]
  %v1174 = vunpack.c.l.b16 %v1158
  %v1175 = vunpack.c.l.b16 %v1159
  %v1176 = vunpack.c.l.b16 %v1160
  %v1177 = vunpack.c.l.b16 %v1161
  %v1178 = vunpack.c.l.b16 %v1162
  %v1179 = vunpack.c.l.b16 %v1163
  %v1180 = vunpack.c.l.b16 %v1164
  %v1181 = vunpack.c.l.b16 %v1165
  %v1182 = vpack.c.b16 %v1175, %v1174
  %v1183 = vpack.c.b16 %v1177, %v1176
  %v1184 = vpack.c.b16 %v1179, %v1178
  %v1185 = vpack.c.b16 %v1181, %v1180
  %v1191 = vsel %vm480, %v1152, 0
  %v1194 = vsel %vm480, %v1153, 0
  %v1197 = vsel %vm480, %v1154, 0
  %v1200 = vsel %vm480, %v1155, 0
  %v1203 = vsel %vm480, %v1156, 0
  %1205 = vmatpush.bf16.msra.mxu0 0
  %1206 = vmatpush.bf16.msra.mxu0 0
  %1207 = vmatpush.bf16.msra.mxu0 0
  %1208 = vmatpush.bf16.msra.mxu0 0
  %1209 = vmatpush.bf16.msra.mxu0 %v1185
  %1210 = vmatpush.bf16.msra.mxu0 %v1184
  %1211 = vmatpush.bf16.msra.mxu0 %v1183
  %1212 = vmatpush.bf16.msra.mxu0 %v1182
  %1213 = vmatmul.bf16.gmra.mxu0 %v1191
  %v1214 = vpop.f32.mrf.mxu0
  %v1215 = vadd.f32 0.0, %v1214
  %v1216 = vpop.f32.mrf.mxu0
  %v1217 = vadd.f32 0.0, %v1216
  %1218 = vmatmul.bf16.gmra.mxu0 %v1194
  %v1219 = vpop.f32.mrf.mxu0
  %v1220 = vadd.f32 0.0, %v1219
  %v1221 = vpop.f32.mrf.mxu0
  %v1222 = vadd.f32 0.0, %v1221
  %1223 = vmatmul.bf16.gmra.mxu0 %v1197
  %v1224 = vpop.f32.mrf.mxu0
  %v1225 = vadd.f32 0.0, %v1224
  %v1226 = vpop.f32.mrf.mxu0
  %v1227 = vadd.f32 0.0, %v1226
  %1228 = vmatmul.bf16.gmra.mxu0 %v1200
  %v1229 = vpop.f32.mrf.mxu0
  %v1230 = vadd.f32 0.0, %v1229
  %v1231 = vpop.f32.mrf.mxu0
  %v1232 = vadd.f32 0.0, %v1231
  %1233 = vmatmul.bf16.gmra.mxu0 %v1203
  %v1234 = vpop.f32.mrf.mxu0
  %v1235 = vadd.f32 0.0, %v1234
  %v1236 = vpop.f32.mrf.mxu0
  %v1237 = vadd.f32 0.0, %v1236
  %1238 = vdwg.mxu0
  %v1239 = vadd.f32 %v1132, %v1215
  %v1240 = vadd.f32 %v1133, %v1217
  %v1241 = vadd.f32 %v1134, %v1220
  %v1242 = vadd.f32 %v1135, %v1222
  %v1243 = vadd.f32 %v1136, %v1225
  %v1244 = vadd.f32 %v1137, %v1227
  %v1245 = vadd.f32 %v1138, %v1230
  %v1246 = vadd.f32 %v1139, %v1232
  %v1247 = vadd.f32 %v1140, %v1235
  %v1248 = vadd.f32 %v1141, %v1237
  %v1249 = vld [vmem:[#allocation2 + $0x58] sm:$0xff]
  %v1250 = vld [vmem:[#allocation2 + $0x60] sm:$0xff]
  %v1251 = vld [vmem:[#allocation2 + $0x68] sm:$0xff]
  %v1252 = vld [vmem:[#allocation2 + $0x70] sm:$0xff]
  %v1253 = vld [vmem:[#allocation2 + $0x78] sm:$0xff]
  %v1254 = vld [vmem:[#allocation2 + $0x80] sm:$0xff]
  %v1255 = vld [vmem:[#allocation2 + $0x88] sm:$0xff]
  %v1256 = vld [vmem:[#allocation2 + $0x90] sm:$0xff]
  %v1257 = vld [vmem:[#allocation2 + $0x98] sm:$0xff]
  %v1258 = vld [vmem:[#allocation2 + $0xa0] sm:$0xff]
  %v1259 = vpack.c.bf16 %v1250, %v1249
  %v1260 = vpack.c.bf16 %v1252, %v1251
  %v1261 = vpack.c.bf16 %v1254, %v1253
  %v1262 = vpack.c.bf16 %v1256, %v1255
  %v1263 = vpack.c.bf16 %v1258, %v1257
  %s1264 = scalar_lea.vmem %s2, 224
  %v1265 = vld [vmem:[%s1264] sm:$0xf]
  %v1266 = vld [vmem:[%s1264 + $0x4] sm:$0xf]
  %v1267 = vld [vmem:[%s1264 + $0x8] sm:$0xf]
  %v1268 = vld [vmem:[%s1264 + $0xc] sm:$0xf]
  %v1269 = vld [vmem:[%s1264 + $0x10] sm:$0xf]
  %v1270 = vld [vmem:[%s1264 + $0x14] sm:$0xf]
  %v1271 = vld [vmem:[%s1264 + $0x18] sm:$0xf]
  %v1272 = vld [vmem:[%s1264 + $0x1c] sm:$0xf]
  %v1281 = vunpack.c.l.b16 %v1265
  %v1282 = vunpack.c.l.b16 %v1266
  %v1283 = vunpack.c.l.b16 %v1267
  %v1284 = vunpack.c.l.b16 %v1268
  %v1285 = vunpack.c.l.b16 %v1269
  %v1286 = vunpack.c.l.b16 %v1270
  %v1287 = vunpack.c.l.b16 %v1271
  %v1288 = vunpack.c.l.b16 %v1272
  %v1289 = vpack.c.b16 %v1282, %v1281
  %v1290 = vpack.c.b16 %v1284, %v1283
  %v1291 = vpack.c.b16 %v1286, %v1285
  %v1292 = vpack.c.b16 %v1288, %v1287
  %v1298 = vsel %vm480, %v1259, 0
  %v1301 = vsel %vm480, %v1260, 0
  %v1304 = vsel %vm480, %v1261, 0
  %v1307 = vsel %vm480, %v1262, 0
  %v1310 = vsel %vm480, %v1263, 0
  %1312 = vmatpush.bf16.msra.mxu0 0
  %1313 = vmatpush.bf16.msra.mxu0 0
  %1314 = vmatpush.bf16.msra.mxu0 0
  %1315 = vmatpush.bf16.msra.mxu0 0
  %1316 = vmatpush.bf16.msra.mxu0 %v1292
  %1317 = vmatpush.bf16.msra.mxu0 %v1291
  %1318 = vmatpush.bf16.msra.mxu0 %v1290
  %1319 = vmatpush.bf16.msra.mxu0 %v1289
  %1320 = vmatmul.bf16.gmra.mxu0 %v1298
  %v1321 = vpop.f32.mrf.mxu0
  %v1322 = vadd.f32 0.0, %v1321
  %v1323 = vpop.f32.mrf.mxu0
  %v1324 = vadd.f32 0.0, %v1323
  %1325 = vmatmul.bf16.gmra.mxu0 %v1301
  %v1326 = vpop.f32.mrf.mxu0
  %v1327 = vadd.f32 0.0, %v1326
  %v1328 = vpop.f32.mrf.mxu0
  %v1329 = vadd.f32 0.0, %v1328
  %1330 = vmatmul.bf16.gmra.mxu0 %v1304
  %v1331 = vpop.f32.mrf.mxu0
  %v1332 = vadd.f32 0.0, %v1331
  %v1333 = vpop.f32.mrf.mxu0
  %v1334 = vadd.f32 0.0, %v1333
  %1335 = vmatmul.bf16.gmra.mxu0 %v1307
  %v1336 = vpop.f32.mrf.mxu0
  %v1337 = vadd.f32 0.0, %v1336
  %v1338 = vpop.f32.mrf.mxu0
  %v1339 = vadd.f32 0.0, %v1338
  %1340 = vmatmul.bf16.gmra.mxu0 %v1310
  %v1341 = vpop.f32.mrf.mxu0
  %v1342 = vadd.f32 0.0, %v1341
  %v1343 = vpop.f32.mrf.mxu0
  %v1344 = vadd.f32 0.0, %v1343
  %1345 = vdwg.mxu0
  %v1346 = vadd.f32 %v1239, %v1322
  %v1347 = vadd.f32 %v1240, %v1324
  %v1348 = vadd.f32 %v1241, %v1327
  %v1349 = vadd.f32 %v1242, %v1329
  %v1350 = vadd.f32 %v1243, %v1332
  %v1351 = vadd.f32 %v1244, %v1334
  %v1352 = vadd.f32 %v1245, %v1337
  %v1353 = vadd.f32 %v1246, %v1339
  %v1354 = vadd.f32 %v1247, %v1342
  %v1355 = vadd.f32 %v1248, %v1344
  %v1356 = vld [vmem:[#allocation2 + $0x9] sm:$0xff]
  %v1357 = vld [vmem:[#allocation2 + $0x11] sm:$0xff]
  %v1358 = vld [vmem:[#allocation2 + $0x19] sm:$0xff]
  %v1359 = vld [vmem:[#allocation2 + $0x21] sm:$0xff]
  %v1360 = vld [vmem:[#allocation2 + $0x29] sm:$0xff]
  %v1361 = vld [vmem:[#allocation2 + $0x31] sm:$0xff]
  %v1362 = vld [vmem:[#allocation2 + $0x39] sm:$0xff]
  %v1363 = vld [vmem:[#allocation2 + $0x41] sm:$0xff]
  %v1364 = vld [vmem:[#allocation2 + $0x49] sm:$0xff]
  %v1365 = vld [vmem:[#allocation2 + $0x51] sm:$0xff]
  %v1366 = vpack.c.bf16 %v1357, %v1356
  %v1367 = vpack.c.bf16 %v1359, %v1358
  %v1368 = vpack.c.bf16 %v1361, %v1360
  %v1369 = vpack.c.bf16 %v1363, %v1362
  %v1370 = vpack.c.bf16 %v1365, %v1364
  %s1371 = scalar_lea.vmem %s2, 256
  %v1372 = vld [vmem:[%s1371] sm:$0xf]
  %v1373 = vld [vmem:[%s1371 + $0x4] sm:$0xf]
  %v1374 = vld [vmem:[%s1371 + $0x8] sm:$0xf]
  %v1375 = vld [vmem:[%s1371 + $0xc] sm:$0xf]
  %v1376 = vld [vmem:[%s1371 + $0x10] sm:$0xf]
  %v1377 = vld [vmem:[%s1371 + $0x14] sm:$0xf]
  %v1378 = vld [vmem:[%s1371 + $0x18] sm:$0xf]
  %v1379 = vld [vmem:[%s1371 + $0x1c] sm:$0xf]
  %v1388 = vunpack.c.l.b16 %v1372
  %v1389 = vunpack.c.l.b16 %v1373
  %v1390 = vunpack.c.l.b16 %v1374
  %v1391 = vunpack.c.l.b16 %v1375
  %v1392 = vunpack.c.l.b16 %v1376
  %v1393 = vunpack.c.l.b16 %v1377
  %v1394 = vunpack.c.l.b16 %v1378
  %v1395 = vunpack.c.l.b16 %v1379
  %v1396 = vpack.c.b16 %v1389, %v1388
  %v1397 = vpack.c.b16 %v1391, %v1390
  %v1398 = vpack.c.b16 %v1393, %v1392
  %v1399 = vpack.c.b16 %v1395, %v1394
  %v1405 = vsel %vm480, %v1366, 0
  %v1408 = vsel %vm480, %v1367, 0
  %v1411 = vsel %vm480, %v1368, 0
  %v1414 = vsel %vm480, %v1369, 0
  %v1417 = vsel %vm480, %v1370, 0
  %1419 = vmatpush.bf16.msra.mxu0 0
  %1420 = vmatpush.bf16.msra.mxu0 0
  %1421 = vmatpush.bf16.msra.mxu0 0
  %1422 = vmatpush.bf16.msra.mxu0 0
  %1423 = vmatpush.bf16.msra.mxu0 %v1399
  %1424 = vmatpush.bf16.msra.mxu0 %v1398
  %1425 = vmatpush.bf16.msra.mxu0 %v1397
  %1426 = vmatpush.bf16.msra.mxu0 %v1396
  %1427 = vmatmul.bf16.gmra.mxu0 %v1405
  %v1428 = vpop.f32.mrf.mxu0
  %v1429 = vadd.f32 0.0, %v1428
  %v1430 = vpop.f32.mrf.mxu0
  %v1431 = vadd.f32 0.0, %v1430
  %1432 = vmatmul.bf16.gmra.mxu0 %v1408
  %v1433 = vpop.f32.mrf.mxu0
  %v1434 = vadd.f32 0.0, %v1433
  %v1435 = vpop.f32.mrf.mxu0
  %v1436 = vadd.f32 0.0, %v1435
  %1437 = vmatmul.bf16.gmra.mxu0 %v1411
  %v1438 = vpop.f32.mrf.mxu0
  %v1439 = vadd.f32 0.0, %v1438
  %v1440 = vpop.f32.mrf.mxu0
  %v1441 = vadd.f32 0.0, %v1440
  %1442 = vmatmul.bf16.gmra.mxu0 %v1414
  %v1443 = vpop.f32.mrf.mxu0
  %v1444 = vadd.f32 0.0, %v1443
  %v1445 = vpop.f32.mrf.mxu0
  %v1446 = vadd.f32 0.0, %v1445
  %1447 = vmatmul.bf16.gmra.mxu0 %v1417
  %v1448 = vpop.f32.mrf.mxu0
  %v1449 = vadd.f32 0.0, %v1448
  %v1450 = vpop.f32.mrf.mxu0
  %v1451 = vadd.f32 0.0, %v1450
  %1452 = vdwg.mxu0
  %v1453 = vadd.f32 %v1346, %v1429
  %v1454 = vadd.f32 %v1347, %v1431
  %v1455 = vadd.f32 %v1348, %v1434
  %v1456 = vadd.f32 %v1349, %v1436
  %v1457 = vadd.f32 %v1350, %v1439
  %v1458 = vadd.f32 %v1351, %v1441
  %v1459 = vadd.f32 %v1352, %v1444
  %v1460 = vadd.f32 %v1353, %v1446
  %v1461 = vadd.f32 %v1354, %v1449
  %v1462 = vadd.f32 %v1355, %v1451
  %v1463 = vld [vmem:[%s3] sm:$0x1]
  %v1465 = vperm.slane %v1463, 0
  %v1467 = vadd.f32 %v1453, %v1465
  %v1468 = vadd.f32 %v1454, %v1465
  %v1469 = vadd.f32 %v1455, %v1465
  %v1470 = vadd.f32 %v1456, %v1465
  %v1471 = vadd.f32 %v1457, %v1465
  %v1472 = vadd.f32 %v1458, %v1465
  %v1473 = vadd.f32 %v1459, %v1465
  %v1474 = vadd.f32 %v1460, %v1465
  %v1475 = vadd.f32 %v1461, %v1465
  %v1476 = vadd.f32 %v1462, %v1465
  %vm1477 = vcmp.ge.f32.partialorder %v1467, 0.0
  %vm1478 = vcmp.ge.f32.partialorder %v1468, 0.0
  %vm1479 = vcmp.ge.f32.partialorder %v1469, 0.0
  %vm1480 = vcmp.ge.f32.partialorder %v1470, 0.0
  %vm1481 = vcmp.ge.f32.partialorder %v1471, 0.0
  %vm1482 = vcmp.ge.f32.partialorder %v1472, 0.0
  %vm1483 = vcmp.ge.f32.partialorder %v1473, 0.0
  %vm1484 = vcmp.ge.f32.partialorder %v1474, 0.0
  %vm1485 = vcmp.ge.f32.partialorder %v1475, 0.0
  %vm1486 = vcmp.ge.f32.partialorder %v1476, 0.0
  %v1487 = vmul.f32 %v1467, 0.2
  %v1488 = vmul.f32 %v1468, 0.2
  %v1489 = vmul.f32 %v1469, 0.2
  %v1490 = vmul.f32 %v1470, 0.2
  %v1491 = vmul.f32 %v1471, 0.2
  %v1492 = vmul.f32 %v1472, 0.2
  %v1493 = vmul.f32 %v1473, 0.2
  %v1494 = vmul.f32 %v1474, 0.2
  %v1495 = vmul.f32 %v1475, 0.2
  %v1496 = vmul.f32 %v1476, 0.2
  %v1497 = vsel %vm1477, %v1467, %v1487
  %v1498 = vsel %vm1478, %v1468, %v1488
  %v1499 = vsel %vm1479, %v1469, %v1489
  %v1500 = vsel %vm1480, %v1470, %v1490
  %v1501 = vsel %vm1481, %v1471, %v1491
  %v1502 = vsel %vm1482, %v1472, %v1492
  %v1503 = vsel %vm1483, %v1473, %v1493
  %v1504 = vsel %vm1484, %v1474, %v1494
  %v1505 = vsel %vm1485, %v1475, %v1495
  %v1506 = vsel %vm1486, %v1476, %v1496
  %v1507 = vld [vmem:[%s4] sm:$0xff]
  %v1508 = vld [vmem:[%s4 + $0x8] sm:$0xff]
  %v1509 = vld [vmem:[%s4 + $0x10] sm:$0xff]
  %v1510 = vld [vmem:[%s4 + $0x18] sm:$0xff]
  %v1511 = vld [vmem:[%s4 + $0x20] sm:$0xff]
  %v1512 = vmul.f32 %v1497, %v1507
  %v1513 = vmul.f32 %v1498, %v1508
  %v1514 = vmul.f32 %v1499, %v1509
  %v1515 = vmul.f32 %v1500, %v1510
  %v1516 = vmul.f32 %v1501, %v1511
  %v1517 = vmul.f32 %v1502, %v1507
  %v1518 = vmul.f32 %v1503, %v1508
  %v1519 = vmul.f32 %v1504, %v1509
  %v1520 = vmul.f32 %v1505, %v1510
  %v1521 = vmul.f32 %v1506, %v1511
  %1522 = vadd.xlane.f32.xlu0 %v1512
  %v1523 = vpop.xlane.xlu0 %1522
  %1524 = vadd.xlane.f32.xlu0 %v1513
  %v1525 = vpop.xlane.xlu0 %1524
  %1526 = vadd.xlane.f32.xlu0 %v1514
  %v1527 = vpop.xlane.xlu0 %1526
  %1528 = vadd.xlane.f32.xlu0 %v1515
  %v1529 = vpop.xlane.xlu0 %1528
  %1530 = vadd.xlane.f32.xlu0 %v1516
  %v1531 = vpop.xlane.xlu0 %1530
  %1532 = vadd.xlane.f32.xlu0 %v1517
  %v1533 = vpop.xlane.xlu0 %1532
  %1534 = vadd.xlane.f32.xlu0 %v1518
  %v1535 = vpop.xlane.xlu0 %1534
  %1536 = vadd.xlane.f32.xlu0 %v1519
  %v1537 = vpop.xlane.xlu0 %1536
  %1538 = vadd.xlane.f32.xlu0 %v1520
  %v1539 = vpop.xlane.xlu0 %1538
  %1540 = vadd.xlane.f32.xlu0 %v1521
  %v1541 = vpop.xlane.xlu0 %1540
  %v1542 = vadd.f32 %v1523, %v1525
  %v1543 = vadd.f32 %v1542, %v1527
  %v1544 = vadd.f32 %v1543, %v1529
  %v1545 = vadd.f32 %v1544, %v1531
  %v1546 = vrot.slane %v1545, 4
  %v1547 = vadd.f32 %v1545, %v1546
  %v1548 = vrot.slane %v1547, 2
  %v1549 = vadd.f32 %v1547, %v1548
  %v1550 = vrot.slane %v1549, 1
  %v1551 = vadd.f32 %v1549, %v1550
  %v1552 = vadd.f32 %v1533, %v1535
  %v1553 = vadd.f32 %v1552, %v1537
  %v1554 = vadd.f32 %v1553, %v1539
  %v1555 = vadd.f32 %v1554, %v1541
  %v1556 = vrot.slane %v1555, 4
  %v1557 = vadd.f32 %v1555, %v1556
  %v1558 = vrot.slane %v1557, 2
  %v1559 = vadd.f32 %v1557, %v1558
  %v1560 = vrot.slane %v1559, 1
  %v1561 = vadd.f32 %v1559, %v1560
  %v1562 = vld [vmem:[#allocation3] sm:$0x1]
  %v1564 = vperm.slane %v1562, 0
  %v1566 = vadd.f32 %v1551, %v1564
  %v1567 = vadd.f32 %v1561, %v1564
  %v1570 = vrot.slane %v1567, 7
  %vm1571 = vcmask 1041409
  %v1572 = vsel %vm1571, %v1570, %v1566
  %vm1574 = vcmask 1024
  %1575 = vst.msk [vmem:[%s6] sm:$0x3] %vm1574, %v1572
  // Predicated region
  $region26: #{discriminator_forward.1} parent=0 // pred_check
    _
  $region27: #{discriminator_forward.1} parent=0 // pred_check_branch
    %1577 = sbr.rel (0) target = $region29
  $region28: #{discriminator_forward.1} parent=0 // pred_region
    _
  $region29: #{discriminator_forward.1} parent=0 // pred_fallthru
    _
  // Predicated region
  $region30: #{discriminator_forward.1} parent=0 // pred_check
    _
  $region31: #{discriminator_forward.1} parent=0 // pred_check_branch
    %1579 = sbr.rel (0) target = $region33
  $region32: #{discriminator_forward.1} parent=0 // pred_region
    _
  $region33: #{discriminator_forward.1} parent=0 // pred_fallthru
    _

</llo_original>
